<compile_context>
chip_gen: v6e
topology: v6e:2x2x1
jax: 0.10.0
libtpu: 0.0.40
codegen_flags: <defaults>
</compile_context>

<pallas_src>
import math

import jax
import jax.numpy as jnp
import numpy as np
from jax.experimental import pallas as pl
from jax.experimental.pallas import tpu as pltpu


# ------------------------------- kernel --------------------------------------

def _decoder_kernel(xf_ref, act_ref,
                    w1x_ref, w1a_ref, b1_ref,
                    w2_ref, b2_ref,
                    w3_ref, b3_ref,
                    out_ref):
    f32 = jnp.float32

    # layer 0: mean + concat + Linear(F+A -> H1) folded into two matmuls.
    #   xf is (tb, N*F) bf16, w1x holds tile(W1x, N)/N (bf16), w1a is (A, H1).
    h = (jnp.dot(xf_ref[...], w1x_ref[...], preferred_element_type=f32)
         + jnp.dot(act_ref[...], w1a_ref[...], preferred_element_type=f32)
         + b1_ref[...])
    h = jnp.maximum(h, 0.0)

    # layer 1: NoisyLinear(H1 -> H2) with pre-folded effective weights (f32).
    h = jnp.maximum(
        jnp.dot(h, w2_ref[...], preferred_element_type=f32) + b2_ref[...], 0.0)

    # layer 2: NoisyLinear(H2 -> 1), emitted lane-dense: contract the (1, H2)
    # weight row against h's H2 axis so the scalar outputs land in lanes.
    y = jax.lax.dot_general(
        w3_ref[...], h,                                   # (1, H2) , (tb, H2)
        dimension_numbers=(((1,), (1,)), ((), ())),
        preferred_element_type=f32)                       # -> (1, tb)
    out_ref[...] = (y + b3_ref[...])[None]                # (1, 1, tb)


# ------------------------------- wrapper --------------------------------------

def _pick_tb(B, x_row_bytes):
    """Batch tile: multiple of 8 (>=128 preferred so matmul M fills MXU rows),
    >= 4 grid steps when possible (pipelining + v7x dual-TC sharding), capped so
    the double-buffered x block stays well under the smallest default scoped
    VMEM budget (16 MiB v5e / 32 MiB v6e-v7x)."""
    budget = 8 * 1024 * 1024                      # x-block budget incl. 2x buffering
    cap = max(8, budget // (2 * x_row_bytes))
    for min_steps in (4, 2):
        for tb in (1024, 512, 256, 128, 64, 32, 16, 8):
            if tb <= cap and B % tb == 0 and B // tb >= min_steps:
                return tb
    return B                                       # tiny batch: one full-array step


def decoder_forward(x, action, eff, *, tb=None):
    """x: (B, N, F) node features per example, action: (B, A). Returns (B, 1) f32."""
    B, N, F = x.shape
    A = action.shape[1]
    H1 = eff["w1x"].shape[1]
    H2 = eff["w2"].shape[1]
    NF = N * F

    if tb is None:
        tb = _pick_tb(B, NF * 2)                   # bf16 x row = 2*NF bytes
    assert B % tb == 0 and (tb == B or tb % 8 == 0), \
        "batch tile must divide B and be a multiple of 8 (or the whole batch)"
    grid = (B // tb,)

    # bf16 over HBM for the dominant reads; mean folded into the layer-0 weight.
    xf = x.reshape(B, NF).astype(jnp.bfloat16)
    act = action.astype(jnp.bfloat16)
    w1x = (jnp.tile(eff["w1x"], (N, 1)) / N).astype(jnp.bfloat16)   # (N*F, H1)
    w1a = eff["w1a"].astype(jnp.bfloat16)                            # (A, H1)
    b1 = eff["b1"].astype(jnp.float32)                               # (1, H1)
    w2 = eff["w2"].astype(jnp.float32)                               # (H1, H2)
    b2 = eff["b2"].astype(jnp.float32)                               # (1, H2)
    w3 = eff["w3"].reshape(1, H2).astype(jnp.float32)                # (1, H2) row
    b3 = eff["b3"].reshape(1, 1).astype(jnp.float32)                 # (1, 1)

    def full(a):
        return pl.BlockSpec(a.shape, lambda b: (0,) * a.ndim)

    flops = 2 * B * (NF * H1 + A * H1 + H1 * H2 + H2)
    bytes_accessed = (2 * (xf.size + act.size + w1x.size + w1a.size)
                      + 4 * (b1.size + w2.size + b2.size + w3.size + b3.size)
                      + 4 * B)

    out = pl.pallas_call(
        _decoder_kernel,
        out_shape=jax.ShapeDtypeStruct((B // tb, 1, tb), jnp.float32),
        grid=grid,
        in_specs=[
            pl.BlockSpec((tb, NF), lambda b: (b, 0)),     # x (batch-blocked, bf16)
            pl.BlockSpec((tb, A), lambda b: (b, 0)),      # action (batch-blocked)
            full(w1x), full(w1a), full(b1),
            full(w2), full(b2), full(w3), full(b3),
        ],
        out_specs=pl.BlockSpec((1, 1, tb), lambda b: (b, 0, 0)),
        compiler_params=pltpu.CompilerParams(
            dimension_semantics=("parallel",)),
        cost_estimate=pl.CostEstimate(
            flops=flops, transcendentals=0, bytes_accessed=int(bytes_accessed)),
    )(xf, act, w1x, w1a, b1, w2, b2, w3, b3)

    return out.reshape(B, 1)


# ----------------------- parameter construction ------------------------------

def make_params(key, F, A, H1, H2, std_init=0.5):
    """Mirror the PyTorch init (weights stored pre-transposed as (in, out))."""
    k0w, k0b, k1w, k1b, k2w, k2b = jax.random.split(key, 6)
    p = {}

    # layer 0: nn.Linear(F + A, H1)
    bnd0 = 1.0 / math.sqrt(F + A)
    w0 = jax.random.uniform(k0w, (F + A, H1), jnp.float32, -bnd0, bnd0)
    p["w1x"], p["w1a"] = w0[:F], w0[F:]
    p["b1"] = jax.random.uniform(k0b, (1, H1), jnp.float32, -bnd0, bnd0)

    # layer 1: NoisyLinear(H1, H2)
    bnd1 = 1.0 / math.sqrt(H1)
    p["l1_wmu"] = jax.random.uniform(k1w, (H1, H2), jnp.float32, -bnd1, bnd1)
    p["l1_bmu"] = jax.random.uniform(k1b, (1, H2), jnp.float32, -bnd1, bnd1)
    p["l1_wsig"] = jnp.full((H1, H2), std_init / math.sqrt(H1), jnp.float32)
    p["l1_bsig"] = jnp.full((1, H2), std_init / math.sqrt(H2), jnp.float32)

    # layer 2: NoisyLinear(H2, 1)
    bnd2 = 1.0 / math.sqrt(H2)
    p["l2_wmu"] = jax.random.uniform(k2w, (H2, 1), jnp.float32, -bnd2, bnd2)
    p["l2_bmu"] = jax.random.uniform(k2b, (1, 1), jnp.float32, -bnd2, bnd2)
    p["l2_wsig"] = jnp.full((H2, 1), std_init / math.sqrt(H2), jnp.float32)
    p["l2_bsig"] = jnp.full((1, 1), std_init / math.sqrt(1.0), jnp.float32)
    return p


def _scale_noise(key, size):
    g = jax.random.normal(key, (size,), jnp.float32)
    return jnp.sign(g) * jnp.sqrt(jnp.abs(g))


def reset_noise(key, p):
    """Factored Gaussian noise as in NoisyLinear.reset_noise (JAX PRNG)."""
    H1, H2 = p["l1_wmu"].shape
    k1i, k1o, k2i, k2o = jax.random.split(key, 4)
    e1_in, e1_out = _scale_noise(k1i, H1), _scale_noise(k1o, H2)
    e2_in, e2_out = _scale_noise(k2i, H2), _scale_noise(k2o, 1)
    p = dict(p)
    p["l1_weps"] = jnp.outer(e1_in, e1_out)    # (in, out) layout
    p["l1_beps"] = e1_out[None, :]
    p["l2_weps"] = jnp.outer(e2_in, e2_out)
    p["l2_beps"] = e2_out[None, :]
    return p


def fold_noisy(p, training=True):
    """Produce the effective (in, out) weights the kernel consumes."""
    eff = {"w1x": p["w1x"], "w1a": p["w1a"], "b1": p["b1"]}
    if training:
        eff["w2"] = p["l1_wmu"] + p["l1_wsig"] * p["l1_weps"]
        eff["b2"] = p["l1_bmu"] + p["l1_bsig"] * p["l1_beps"]
        eff["w3"] = p["l2_wmu"] + p["l2_wsig"] * p["l2_weps"]
        eff["b3"] = p["l2_bmu"] + p["l2_bsig"] * p["l2_beps"]
    else:
        eff["w2"], eff["b2"] = p["l1_wmu"], p["l1_bmu"]
        eff["w3"], eff["b3"] = p["l2_wmu"], p["l2_bmu"]
    return eff


# ----------------------------- reference --------------------------------------

def reference_forward(x, action, eff):
    """Pure-JAX mirror of decoderI.forward for one (x, action) pair, with the
    input / layer-0 weight precision (bf16) matched to the kernel."""
    f32, bf = jnp.float32, jnp.bfloat16
    xm = jnp.mean(x.astype(bf).astype(f32), axis=0)                  # (F,)
    v = jnp.concatenate([xm, action.astype(bf).astype(f32)], 0)      # (F + A,)
    w1 = jnp.concatenate([eff["w1x"], eff["w1a"]], 0).astype(bf).astype(f32)
    h = jnp.maximum(v @ w1 + eff["b1"][0], 0.0)
    h = jnp.maximum(h @ eff["w2"] + eff["b2"][0], 0.0)
    return h @ eff["w3"] + eff["b3"][0]                              # (1,)


if __name__ == "__main__":
    F = 128            # node_feature_size (module default)
    A = 3              # action dim implied by Linear(node_feature_size + 3, ...)
    H1, H2 = 64, 32    # linear_layers_size default
    N = 8              # nodes per graph (axis reduced by x.mean(dim=0))

    key = jax.random.PRNGKey(0)
    kx, ka, kp, kn = jax.random.split(key, 4)

    params = make_params(kp, F, A, H1, H2)
    params = reset_noise(kn, params)
    # TODO(synk): epsilon buffers are generated with jax.random, so exact noise
    # values differ from PyTorch's torch.randn; the training-mode fold
    # (mu + sigma*eps) and eval-mode (mu only) semantics are preserved.
    eff = fold_noisy(params, training=True)

    fwd = jax.jit(decoder_forward)

    # B=512 exercises the pipelined multi-tile path (tb=128, grid=(4,));
    # B=2 exercises the tiny-batch fallback (whole batch, full-array blocks).
    for B in (512, 2):
        x = jax.random.normal(jax.random.fold_in(kx, B), (B, N, F), jnp.float32)
        action = jax.random.normal(jax.random.fold_in(ka, B), (B, A), jnp.float32)

        q = jax.block_until_ready(fwd(x, action, eff))
        assert q.shape == (B, 1)

        q_ref = jax.vmap(lambda xb, ab: reference_forward(xb, ab, eff))(x, action)
        np.testing.assert_allclose(np.asarray(q), np.asarray(q_ref),
                                   rtol=2e-3, atol=2e-3)

    print("KERNEL_OK")
</pallas_src>

<mosaic_0001>
module attributes {stable_mosaic.version = 11 : i64} {
  func.func @_decoder_kernel(%arg0: i32, %arg1: memref<128x1024xbf16, #tpu.memory_space<vmem>>, %arg2: memref<128x3xbf16, #tpu.memory_space<vmem>>, %arg3: memref<1024x64xbf16, #tpu.memory_space<vmem>>, %arg4: memref<3x64xbf16, #tpu.memory_space<vmem>>, %arg5: memref<1x64xf32, #tpu.memory_space<vmem>>, %arg6: memref<64x32xf32, #tpu.memory_space<vmem>>, %arg7: memref<1x32xf32, #tpu.memory_space<vmem>>, %arg8: memref<1x32xf32, #tpu.memory_space<vmem>>, %arg9: memref<1x1xf32, #tpu.memory_space<vmem>>, %arg10: memref<1x1x128xf32, #tpu.memory_space<vmem>>) attributes {dimension_semantics = [#tpu.dimension_semantics<parallel>], iteration_bounds = array<i64: 4>, scalar_prefetch = 0 : i64, scratch_operands = 0 : i64, tpu.core_type = #tpu.core_type<tc>, window_params = [{transform_indices = @transform_0, window_bounds = array<i64: 128, 1024>}, {transform_indices = @transform_1, window_bounds = array<i64: 128, 3>}, {pipeline_mode = #tpu.pipeline_mode<synchronous>, transform_indices = @transform_2, window_bounds = array<i64: 1024, 64>}, {pipeline_mode = #tpu.pipeline_mode<synchronous>, transform_indices = @transform_3, window_bounds = array<i64: 3, 64>}, {pipeline_mode = #tpu.pipeline_mode<synchronous>, transform_indices = @transform_4, window_bounds = array<i64: 1, 64>}, {pipeline_mode = #tpu.pipeline_mode<synchronous>, transform_indices = @transform_5, window_bounds = array<i64: 64, 32>}, {pipeline_mode = #tpu.pipeline_mode<synchronous>, transform_indices = @transform_6, window_bounds = array<i64: 1, 32>}, {pipeline_mode = #tpu.pipeline_mode<synchronous>, transform_indices = @transform_7, window_bounds = array<i64: 1, 32>}, {pipeline_mode = #tpu.pipeline_mode<synchronous>, transform_indices = @transform_8, window_bounds = array<i64: 1, 1>}, {transform_indices = @transform_9, window_bounds = array<i64: 1, 1, 128>}]} {
    %c0 = arith.constant 0 : index
    %c0_0 = arith.constant 0 : index
    %0 = vector.load %arg1[%c0, %c0_0] : memref<128x1024xbf16, #tpu.memory_space<vmem>>, vector<128x1024xbf16>
    %c0_1 = arith.constant 0 : index
    %c0_2 = arith.constant 0 : index
    %1 = vector.load %arg3[%c0_1, %c0_2] : memref<1024x64xbf16, #tpu.memory_space<vmem>>, vector<1024x64xbf16>
    %cst = arith.constant dense<0.000000e+00> : vector<128x64xf32>
    %2 = tpu.matmul %0, %1, %cst {dimension_numbers = #tpu.dot_dimension_numbers<[1], [0], [0], [1], [0, 0, 1, 1], [], []>} : vector<128x1024xbf16>, vector<1024x64xbf16>, vector<128x64xf32> -> vector<128x64xf32>
    %c0_3 = arith.constant 0 : index
    %c0_4 = arith.constant 0 : index
    %3 = vector.load %arg2[%c0_3, %c0_4] : memref<128x3xbf16, #tpu.memory_space<vmem>>, vector<128x3xbf16>
    %c0_5 = arith.constant 0 : index
    %c0_6 = arith.constant 0 : index
    %4 = vector.load %arg4[%c0_5, %c0_6] : memref<3x64xbf16, #tpu.memory_space<vmem>>, vector<3x64xbf16>
    %cst_7 = arith.constant dense<0.000000e+00> : vector<128x64xf32>
    %5 = tpu.matmul %3, %4, %cst_7 {dimension_numbers = #tpu.dot_dimension_numbers<[1], [0], [0], [1], [0, 0, 1, 1], [], []>} : vector<128x3xbf16>, vector<3x64xbf16>, vector<128x64xf32> -> vector<128x64xf32>
    %6 = arith.addf %2, %5 : vector<128x64xf32>
    %c0_8 = arith.constant 0 : index
    %c0_9 = arith.constant 0 : index
    %7 = vector.load %arg5[%c0_8, %c0_9] : memref<1x64xf32, #tpu.memory_space<vmem>>, vector<1x64xf32>
    %8 = vector.broadcast %7 : vector<1x64xf32> to vector<128x64xf32>
    %9 = arith.addf %6, %8 : vector<128x64xf32>
    %cst_10 = arith.constant 0.000000e+00 : f32
    %10 = vector.broadcast %cst_10 : f32 to vector<128x64xf32>
    %11 = arith.maximumf %9, %10 : vector<128x64xf32>
    %c0_11 = arith.constant 0 : index
    %c0_12 = arith.constant 0 : index
    %12 = vector.load %arg6[%c0_11, %c0_12] : memref<64x32xf32, #tpu.memory_space<vmem>>, vector<64x32xf32>
    %cst_13 = arith.constant dense<0.000000e+00> : vector<128x32xf32>
    %13 = tpu.matmul %11, %12, %cst_13 {dimension_numbers = #tpu.dot_dimension_numbers<[1], [0], [0], [1], [0, 0, 1, 1], [], []>} : vector<128x64xf32>, vector<64x32xf32>, vector<128x32xf32> -> vector<128x32xf32>
    %c0_14 = arith.constant 0 : index
    %c0_15 = arith.constant 0 : index
    %14 = vector.load %arg7[%c0_14, %c0_15] : memref<1x32xf32, #tpu.memory_space<vmem>>, vector<1x32xf32>
    %15 = vector.broadcast %14 : vector<1x32xf32> to vector<128x32xf32>
    %16 = arith.addf %13, %15 : vector<128x32xf32>
    %cst_16 = arith.constant 0.000000e+00 : f32
    %17 = vector.broadcast %cst_16 : f32 to vector<128x32xf32>
    %18 = arith.maximumf %16, %17 : vector<128x32xf32>
    %c0_17 = arith.constant 0 : index
    %c0_18 = arith.constant 0 : index
    %19 = vector.load %arg8[%c0_17, %c0_18] : memref<1x32xf32, #tpu.memory_space<vmem>>, vector<1x32xf32>
    %cst_19 = arith.constant dense<0.000000e+00> : vector<1x128xf32>
    %20 = tpu.matmul %19, %18, %cst_19 {dimension_numbers = #tpu.dot_dimension_numbers<[1], [1], [0], [0], [0, 0, 1, 0], [], []>} : vector<1x32xf32>, vector<128x32xf32>, vector<1x128xf32> -> vector<1x128xf32>
    %c0_20 = arith.constant 0 : index
    %c0_21 = arith.constant 0 : index
    %21 = vector.load %arg9[%c0_20, %c0_21] : memref<1x1xf32, #tpu.memory_space<vmem>>, vector<1x1xf32>
    %22 = vector.broadcast %21 : vector<1x1xf32> to vector<1x128xf32>
    %23 = arith.addf %20, %22 : vector<1x128xf32>
    %24 = vector.shape_cast %23 : vector<1x128xf32> to vector<1x1x128xf32>
    %c0_22 = arith.constant 0 : index
    %c0_23 = arith.constant 0 : index
    %c0_24 = arith.constant 0 : index
    %25 = vector.load %arg10[%c0_22, %c0_23, %c0_24] : memref<1x1x128xf32, #tpu.memory_space<vmem>>, vector<1x1x128xf32>
    tpu.vector_store %arg10[%c0_22, %c0_23, %c0_24], %24 {strides = array<i32>} : memref<1x1x128xf32, #tpu.memory_space<vmem>>, vector<1x1x128xf32>,
    return
  }
  func.func @transform_0(%arg0: i32) -> (i32, i32) {
    %c0_i32 = arith.constant 0 : i32
    %c0_i32_0 = arith.constant 0 : i32
    return %arg0, %c0_i32 : i32, i32
  }
  func.func @transform_1(%arg0: i32) -> (i32, i32) {
    %c0_i32 = arith.constant 0 : i32
    %c0_i32_0 = arith.constant 0 : i32
    return %arg0, %c0_i32 : i32, i32
  }
  func.func @transform_2(%arg0: i32) -> (i32, i32) {
    %c0_i32 = arith.constant 0 : i32
    %c0_i32_0 = arith.constant 0 : i32
    %c0_i32_1 = arith.constant 0 : i32
    return %c0_i32, %c0_i32_0 : i32, i32
  }
  func.func @transform_3(%arg0: i32) -> (i32, i32) {
    %c0_i32 = arith.constant 0 : i32
    %c0_i32_0 = arith.constant 0 : i32
    %c0_i32_1 = arith.constant 0 : i32
    return %c0_i32, %c0_i32_0 : i32, i32
  }
  func.func @transform_4(%arg0: i32) -> (i32, i32) {
    %c0_i32 = arith.constant 0 : i32
    %c0_i32_0 = arith.constant 0 : i32
    %c0_i32_1 = arith.constant 0 : i32
    return %c0_i32, %c0_i32_0 : i32, i32
  }
  func.func @transform_5(%arg0: i32) -> (i32, i32) {
    %c0_i32 = arith.constant 0 : i32
    %c0_i32_0 = arith.constant 0 : i32
    %c0_i32_1 = arith.constant 0 : i32
    return %c0_i32, %c0_i32_0 : i32, i32
  }
  func.func @transform_6(%arg0: i32) -> (i32, i32) {
    %c0_i32 = arith.constant 0 : i32
    %c0_i32_0 = arith.constant 0 : i32
    %c0_i32_1 = arith.constant 0 : i32
    return %c0_i32, %c0_i32_0 : i32, i32
  }
  func.func @transform_7(%arg0: i32) -> (i32, i32) {
    %c0_i32 = arith.constant 0 : i32
    %c0_i32_0 = arith.constant 0 : i32
    %c0_i32_1 = arith.constant 0 : i32
    return %c0_i32, %c0_i32_0 : i32, i32
  }
  func.func @transform_8(%arg0: i32) -> (i32, i32) {
    %c0_i32 = arith.constant 0 : i32
    %c0_i32_0 = arith.constant 0 : i32
    %c0_i32_1 = arith.constant 0 : i32
    return %c0_i32, %c0_i32_0 : i32, i32
  }
  func.func @transform_9(%arg0: i32) -> (i32, i32, i32) {
    %c0_i32 = arith.constant 0 : i32
    %c0_i32_0 = arith.constant 0 : i32
    %c0_i32_1 = arith.constant 0 : i32
    return %arg0, %c0_i32, %c0_i32_0 : i32, i32, i32
  }
}

</mosaic_0001>

<llo_original>
// kernel: decoder_forward.1
$region0: #{decoder_forward.1}
  #allocation0 [shape = 'u32[]', space=smem, size = 0x4, offset = 0x4, fixed_abs, tag = 'smem constant byte address 0x4 - core index']
  #allocation1 [shape = 'u32[144,128]{1,0:T(1,128)}', space=vmem, size = 0x12000, scoped, tag = 'internal scratch']
  #allocation2 [shape = 'f32[1,1]{1,0:T(1,128)S(1)}', space=vmem, size = 0x200, scoped, tag = 'scoped memory for decoder_forward.1']
  %s0 = inlined_call_operand.vmem [shape: bf16[512,1024], index: 0, kind: input, shape index: {}]
  %s1 = inlined_call_operand.vmem [shape: bf16[512,3], index: 1, kind: input, shape index: {}]
  %s2 = inlined_call_operand.vmem [shape: bf16[1024,64], index: 2, kind: input, shape index: {}]
  %s3 = inlined_call_operand.vmem [shape: bf16[3,64], index: 3, kind: input, shape index: {}]
  %s4 = inlined_call_operand.vmem [shape: f32[1,64], index: 4, kind: input, shape index: {}]
  %s5 = inlined_call_operand.vmem [shape: f32[64,32], index: 5, kind: input, shape index: {}]
  %s6 = inlined_call_operand.vmem [shape: f32[1,32], index: 6, kind: input, shape index: {}]
  %s7 = inlined_call_operand.vmem [shape: f32[1,32], index: 7, kind: input, shape index: {}]
  %s8 = inlined_call_operand.<no memory space> [shape: f32[1,1], index: 8, kind: input, shape index: {}]
  %s9 = inlined_call_operand.hbm [shape: f32[4,1,128], index: 9, kind: output, shape index: {}]
  %s10 = sld [smem:[#allocation0]]
  $region69: #{decoder_forward.1} parent=0
    _
  %s12 = ssub.s32 1, %s10
  %s13 = scalar_select 0, %s12, %s10
  %v14 = vstv %s8
  %15 = vst [vmem:[#allocation2] sm:$0x1] %v14
  $region1: #{decoder_forward.1} parent=0
    #allocation3 [shape = 'u8[1024]{0}', space=vmem, size = 0x400, scoped, tag = 'output window, operand 0']
    #allocation4 [shape = 's32[2]{0}', space=sflag, size = 0x8, scoped, tag = 'scoped memory for decoder_forward.1']
    %16 = vsyncpa [#allocation4], 0
    %s17 = scalar_lea.sflag [#allocation4], 1
    %18 = vsyncpa %s17, 0
    loop: start=0, step=1, limit=6
    $region2: #{decoder_forward.1} parent=1 // loop_pre_header
      _
    $region3: #{decoder_forward.1} parent=1 // loop_header
      %s20 = sphi 0, %s24
      %p21 = scmp.ge.s32.totalorder %s20, 6
      %s30 = sphi 0, %s32
      %s33 = sphi 0, %s30
      %s34 = sphi 0, %s33
      %s50 = sphi 0, %s34
      %s56 = sphi 0, %s58
      %s59 = sphi 0, %s56
      %s60 = sphi 0, %s59
      %s76 = sphi 0, %s60
      %s80 = sphi 0, %s80
      %s82 = sphi 0, %s80
      %s83 = sphi 0, %s82
      %s97 = sphi 0, %s83
      %s101 = sphi 0, %s101
      %s103 = sphi 0, %s101
      %s104 = sphi 0, %s103
      %s118 = sphi 0, %s104
      %s122 = sphi 0, %s122
      %s124 = sphi 0, %s122
      %s125 = sphi 0, %s124
      %s139 = sphi 0, %s125
      %s143 = sphi 0, %s143
      %s145 = sphi 0, %s143
      %s146 = sphi 0, %s145
      %s160 = sphi 0, %s146
      %s164 = sphi 0, %s164
      %s166 = sphi 0, %s164
      %s167 = sphi 0, %s166
      %s181 = sphi 0, %s167
      %s185 = sphi 0, %s185
      %s187 = sphi 0, %s185
      %s188 = sphi 0, %s187
      %s202 = sphi 0, %s188
      %s206 = sphi 0, %s206
      %s208 = sphi 0, %s206
      %s209 = sphi 0, %s208
      %s223 = sphi 0, %s209
      %s229 = sphi 0, %s231
      %s232 = sphi 0, %s229
      %s233 = sphi 0, %s232
      %s249 = sphi 0, %s233
    $region4: #{decoder_forward.1} parent=1 // loop_header_branch
      %23 = sbr.rel (%p21) target = $region8
    $region5: #{decoder_forward.1} parent=1 // loop_body
      %s25 = ssub.s32 %s20, 1
      %s26 = ssub.s32 %s20, 2
      %s27 = sadd.s32 %s20, 1
      %s28 = ssub.s32 %s20, %s27
      %p29 = scmp.eq.s32.totalorder %s28, 0
      %s31 = sadd.s32 %s30, 1
      %s32 = scalar_select %p29, %s30, %s31
      %p35 = pneg %p29
      %p36 = scmp.eq.s32.totalorder %s20, 3
      %p37 = por %p35, %p36
      %p38 = scmp.ne.s32.totalorder %s30, %s33
      %p39 = scmp.eq.s32.totalorder %s20, 0
      %p40 = por %p38, %p39
      %p41 = scmp.ne.s32.totalorder %s30, %s33
      %p42 = scmp.eq.s32.totalorder %s25, 3
      %p43 = por %p41, %p42
      %p44 = scmp.ne.s32.totalorder %s33, %s34
      %p45 = scmp.eq.s32.totalorder %s25, 0
      %p46 = por %p44, %p45
      %p47 = scmp.ne.s32.totalorder %s33, %s34
      %p48 = scmp.eq.s32.totalorder %s26, 3
      %p49 = por %p47, %p48
      %p51 = scmp.ne.s32.totalorder %s34, %s50
      %p52 = scmp.eq.s32.totalorder %s26, 0
      %p53 = por %p51, %p52
      %s54 = ssub.s32 %s20, %s27
      %p55 = scmp.eq.s32.totalorder %s54, 0
      %s57 = sadd.s32 %s56, 1
      %s58 = scalar_select %p55, %s56, %s57
      %p61 = pneg %p55
      %p62 = scmp.eq.s32.totalorder %s20, 3
      %p63 = por %p61, %p62
      %p64 = scmp.ne.s32.totalorder %s56, %s59
      %p65 = scmp.eq.s32.totalorder %s20, 0
      %p66 = por %p64, %p65
      %p67 = scmp.ne.s32.totalorder %s56, %s59
      %p68 = scmp.eq.s32.totalorder %s25, 3
      %p69 = por %p67, %p68
      %p70 = scmp.ne.s32.totalorder %s59, %s60
      %p71 = scmp.eq.s32.totalorder %s25, 0
      %p72 = por %p70, %p71
      %p73 = scmp.ne.s32.totalorder %s59, %s60
      %p74 = scmp.eq.s32.totalorder %s26, 3
      %p75 = por %p73, %p74
      %p77 = scmp.ne.s32.totalorder %s60, %s76
      %p78 = scmp.eq.s32.totalorder %s26, 0
      %p79 = por %p77, %p78
      %s81 = sadd.s32 %s80, 1
      %p84 = scmp.eq.s32.totalorder %s20, 3
      %p85 = scmp.ne.s32.totalorder %s80, %s82
      %p86 = scmp.eq.s32.totalorder %s20, 0
      %p87 = por %p85, %p86
      %p88 = scmp.ne.s32.totalorder %s80, %s82
      %p89 = scmp.eq.s32.totalorder %s25, 3
      %p90 = por %p88, %p89
      %p91 = scmp.ne.s32.totalorder %s82, %s83
      %p92 = scmp.eq.s32.totalorder %s25, 0
      %p93 = por %p91, %p92
      %p94 = scmp.ne.s32.totalorder %s82, %s83
      %p95 = scmp.eq.s32.totalorder %s26, 3
      %p96 = por %p94, %p95
      %p98 = scmp.ne.s32.totalorder %s83, %s97
      %p99 = scmp.eq.s32.totalorder %s26, 0
      %p100 = por %p98, %p99
      %s102 = sadd.s32 %s101, 1
      %p105 = scmp.eq.s32.totalorder %s20, 3
      %p106 = scmp.ne.s32.totalorder %s101, %s103
      %p107 = scmp.eq.s32.totalorder %s20, 0
      %p108 = por %p106, %p107
      %p109 = scmp.ne.s32.totalorder %s101, %s103
      %p110 = scmp.eq.s32.totalorder %s25, 3
      %p111 = por %p109, %p110
      %p112 = scmp.ne.s32.totalorder %s103, %s104
      %p113 = scmp.eq.s32.totalorder %s25, 0
      %p114 = por %p112, %p113
      %p115 = scmp.ne.s32.totalorder %s103, %s104
      %p116 = scmp.eq.s32.totalorder %s26, 3
      %p117 = por %p115, %p116
      %p119 = scmp.ne.s32.totalorder %s104, %s118
      %p120 = scmp.eq.s32.totalorder %s26, 0
      %p121 = por %p119, %p120
      %s123 = sadd.s32 %s122, 1
      %p126 = scmp.eq.s32.totalorder %s20, 3
      %p127 = scmp.ne.s32.totalorder %s122, %s124
      %p128 = scmp.eq.s32.totalorder %s20, 0
      %p129 = por %p127, %p128
      %p130 = scmp.ne.s32.totalorder %s122, %s124
      %p131 = scmp.eq.s32.totalorder %s25, 3
      %p132 = por %p130, %p131
      %p133 = scmp.ne.s32.totalorder %s124, %s125
      %p134 = scmp.eq.s32.totalorder %s25, 0
      %p135 = por %p133, %p134
      %p136 = scmp.ne.s32.totalorder %s124, %s125
      %p137 = scmp.eq.s32.totalorder %s26, 3
      %p138 = por %p136, %p137
      %p140 = scmp.ne.s32.totalorder %s125, %s139
      %p141 = scmp.eq.s32.totalorder %s26, 0
      %p142 = por %p140, %p141
      %s144 = sadd.s32 %s143, 1
      %p147 = scmp.eq.s32.totalorder %s20, 3
      %p148 = scmp.ne.s32.totalorder %s143, %s145
      %p149 = scmp.eq.s32.totalorder %s20, 0
      %p150 = por %p148, %p149
      %p151 = scmp.ne.s32.totalorder %s143, %s145
      %p152 = scmp.eq.s32.totalorder %s25, 3
      %p153 = por %p151, %p152
      %p154 = scmp.ne.s32.totalorder %s145, %s146
      %p155 = scmp.eq.s32.totalorder %s25, 0
      %p156 = por %p154, %p155
      %p157 = scmp.ne.s32.totalorder %s145, %s146
      %p158 = scmp.eq.s32.totalorder %s26, 3
      %p159 = por %p157, %p158
      %p161 = scmp.ne.s32.totalorder %s146, %s160
      %p162 = scmp.eq.s32.totalorder %s26, 0
      %p163 = por %p161, %p162
      %s165 = sadd.s32 %s164, 1
      %p168 = scmp.eq.s32.totalorder %s20, 3
      %p169 = scmp.ne.s32.totalorder %s164, %s166
      %p170 = scmp.eq.s32.totalorder %s20, 0
      %p171 = por %p169, %p170
      %p172 = scmp.ne.s32.totalorder %s164, %s166
      %p173 = scmp.eq.s32.totalorder %s25, 3
      %p174 = por %p172, %p173
      %p175 = scmp.ne.s32.totalorder %s166, %s167
      %p176 = scmp.eq.s32.totalorder %s25, 0
      %p177 = por %p175, %p176
      %p178 = scmp.ne.s32.totalorder %s166, %s167
      %p179 = scmp.eq.s32.totalorder %s26, 3
      %p180 = por %p178, %p179
      %p182 = scmp.ne.s32.totalorder %s167, %s181
      %p183 = scmp.eq.s32.totalorder %s26, 0
      %p184 = por %p182, %p183
      %s186 = sadd.s32 %s185, 1
      %p189 = scmp.eq.s32.totalorder %s20, 3
      %p190 = scmp.ne.s32.totalorder %s185, %s187
      %p191 = scmp.eq.s32.totalorder %s20, 0
      %p192 = por %p190, %p191
      %p193 = scmp.ne.s32.totalorder %s185, %s187
      %p194 = scmp.eq.s32.totalorder %s25, 3
      %p195 = por %p193, %p194
      %p196 = scmp.ne.s32.totalorder %s187, %s188
      %p197 = scmp.eq.s32.totalorder %s25, 0
      %p198 = por %p196, %p197
      %p199 = scmp.ne.s32.totalorder %s187, %s188
      %p200 = scmp.eq.s32.totalorder %s26, 3
      %p201 = por %p199, %p200
      %p203 = scmp.ne.s32.totalorder %s188, %s202
      %p204 = scmp.eq.s32.totalorder %s26, 0
      %p205 = por %p203, %p204
      %s207 = sadd.s32 %s206, 1
      %p210 = scmp.eq.s32.totalorder %s20, 3
      %p211 = scmp.ne.s32.totalorder %s206, %s208
      %p212 = scmp.eq.s32.totalorder %s20, 0
      %p213 = por %p211, %p212
      %p214 = scmp.ne.s32.totalorder %s206, %s208
      %p215 = scmp.eq.s32.totalorder %s25, 3
      %p216 = por %p214, %p215
      %p217 = scmp.ne.s32.totalorder %s208, %s209
      %p218 = scmp.eq.s32.totalorder %s25, 0
      %p219 = por %p217, %p218
      %p220 = scmp.ne.s32.totalorder %s208, %s209
      %p221 = scmp.eq.s32.totalorder %s26, 3
      %p222 = por %p220, %p221
      %p224 = scmp.ne.s32.totalorder %s209, %s223
      %p225 = scmp.eq.s32.totalorder %s26, 0
      %p226 = por %p224, %p225
      %s227 = ssub.s32 %s20, %s27
      %p228 = scmp.eq.s32.totalorder %s227, 0
      %s230 = sadd.s32 %s229, 1
      %s231 = scalar_select %p228, %s229, %s230
      %p234 = pneg %p228
      %p235 = scmp.eq.s32.totalorder %s20, 3
      %p236 = por %p234, %p235
      %p237 = scmp.ne.s32.totalorder %s229, %s232
      %p238 = scmp.eq.s32.totalorder %s20, 0
      %p239 = por %p237, %p238
      %p240 = scmp.ne.s32.totalorder %s229, %s232
      %p241 = scmp.eq.s32.totalorder %s25, 3
      %p242 = por %p240, %p241
      %p243 = scmp.ne.s32.totalorder %s232, %s233
      %p244 = scmp.eq.s32.totalorder %s25, 0
      %p245 = por %p243, %p244
      %p246 = scmp.ne.s32.totalorder %s232, %s233
      %p247 = scmp.eq.s32.totalorder %s26, 3
      %p248 = por %p246, %p247
      %p250 = scmp.ne.s32.totalorder %s233, %s249
      %p251 = scmp.eq.s32.totalorder %s26, 0
      %p252 = por %p250, %p251
      %p253 = scmp.le.s32.totalorder 1, %s20
      %p254 = scmp.lt.s32.totalorder %s20, 5
      %p255 = pnand %p253, %p254
      %p256 = pneg %p255
      // Predicated region
      $region9: #{decoder_forward.1} parent=5 // pred_check
        _
      $region10: #{decoder_forward.1} parent=5 // pred_check_branch
        %258 = sbr.rel (%p255) target = $region12
      $region11: #{decoder_forward.1} parent=5 // pred_region
        %s259 = ssub.s32 %s20, 1
        // Predicated region
        $region13: #{decoder_forward.1} parent=11 // pred_check
          %p260 = pneg %p93
        $region14: #{decoder_forward.1} parent=11 // pred_check_branch
          %262 = sbr.rel (%p260) target = $region16
        $region15: #{decoder_forward.1} parent=11 // pred_region
          _
        $region16: #{decoder_forward.1} parent=11 // pred_fallthru
          _
        // Predicated region
        $region17: #{decoder_forward.1} parent=11 // pred_check
          %p263 = pneg %p114
        $region18: #{decoder_forward.1} parent=11 // pred_check_branch
          %265 = sbr.rel (%p263) target = $region20
        $region19: #{decoder_forward.1} parent=11 // pred_region
          _
        $region20: #{decoder_forward.1} parent=11 // pred_fallthru
          _
        // Predicated region
        $region21: #{decoder_forward.1} parent=11 // pred_check
          %p266 = pneg %p135
        $region22: #{decoder_forward.1} parent=11 // pred_check_branch
          %268 = sbr.rel (%p266) target = $region24
        $region23: #{decoder_forward.1} parent=11 // pred_region
          _
        $region24: #{decoder_forward.1} parent=11 // pred_fallthru
          _
        // Predicated region
        $region25: #{decoder_forward.1} parent=11 // pred_check
          %p269 = pneg %p156
        $region26: #{decoder_forward.1} parent=11 // pred_check_branch
          %271 = sbr.rel (%p269) target = $region28
        $region27: #{decoder_forward.1} parent=11 // pred_region
          _
        $region28: #{decoder_forward.1} parent=11 // pred_fallthru
          _
        // Predicated region
        $region29: #{decoder_forward.1} parent=11 // pred_check
          %p272 = pneg %p177
        $region30: #{decoder_forward.1} parent=11 // pred_check_branch
          %274 = sbr.rel (%p272) target = $region32
        $region31: #{decoder_forward.1} parent=11 // pred_region
          _
        $region32: #{decoder_forward.1} parent=11 // pred_fallthru
          _
        // Predicated region
        $region33: #{decoder_forward.1} parent=11 // pred_check
          %p275 = pneg %p198
        $region34: #{decoder_forward.1} parent=11 // pred_check_branch
          %277 = sbr.rel (%p275) target = $region36
        $region35: #{decoder_forward.1} parent=11 // pred_region
          _
        $region36: #{decoder_forward.1} parent=11 // pred_fallthru
          _
        // Predicated region
        $region37: #{decoder_forward.1} parent=11 // pred_check
          %p278 = pneg %p219
        $region38: #{decoder_forward.1} parent=11 // pred_check_branch
          %280 = sbr.rel (%p278) target = $region40
        $region39: #{decoder_forward.1} parent=11 // pred_region
          _
        $region40: #{decoder_forward.1} parent=11 // pred_fallthru
          _
      $region12: #{decoder_forward.1} parent=5 // pred_fallthru
        _
      %p281 = scmp.lt.s32.totalorder %s20, 4
      // Predicated region
      $region41: #{decoder_forward.1} parent=5 // pred_check
        %p282 = pneg %p281
      $region42: #{decoder_forward.1} parent=5 // pred_check_branch
        %284 = sbr.rel (%p282) target = $region44
      $region43: #{decoder_forward.1} parent=5 // pred_region
        // Predicated region
        $region45: #{decoder_forward.1} parent=43 // pred_check
          %p285 = pneg %p40
        $region46: #{decoder_forward.1} parent=43 // pred_check_branch
          %287 = sbr.rel (%p285) target = $region48
        $region47: #{decoder_forward.1} parent=43 // pred_region
          %s288 = smul.u32 16, %s20
          %p289 = scmp.lt.s32.totalorder %s288, 63
          %s290 = scalar_select %p289, %s288, 63
          %s291 = smul.addr %s290, 8
          %s292 = smul.addr %s291, 4
          %s293 = scalar_lea.vmem %s0, %s292
          %s294 = smul.u32 16, %s20
        $region48: #{decoder_forward.1} parent=43 // pred_fallthru
          _
        // Predicated region
        $region49: #{decoder_forward.1} parent=43 // pred_check
          %p295 = pneg %p66
        $region50: #{decoder_forward.1} parent=43 // pred_check_branch
          %297 = sbr.rel (%p295) target = $region52
        $region51: #{decoder_forward.1} parent=43 // pred_region
          %s298 = smul.u32 16, %s20
          %p299 = scmp.lt.s32.totalorder %s298, 63
          %s300 = scalar_select %p299, %s298, 63
          %s301 = smul.addr %s300, 4
          %s302 = scalar_lea.vmem %s1, %s301
          %s303 = smul.u32 16, %s20
        $region52: #{decoder_forward.1} parent=43 // pred_fallthru
          _
      $region44: #{decoder_forward.1} parent=5 // pred_fallthru
        _
      %p304 = scmp.le.s32.totalorder 1, %s20
      %p305 = scmp.lt.s32.totalorder %s20, 5
      %p306 = pnand %p304, %p305
      %p307 = pneg %p306
      // Predicated region
      $region53: #{decoder_forward.1} parent=5 // pred_check
        _
      $region54: #{decoder_forward.1} parent=5 // pred_check_branch
        %309 = sbr.rel (%p306) target = $region56
      $region55: #{decoder_forward.1} parent=5 // pred_region
        %s310 = ssub.s32 %s20, 1
        %s311 = smul.u32 16, %s25
        %p312 = scmp.lt.s32.totalorder %s311, 63
        %s313 = scalar_select %p312, %s311, 63
        %s314 = smul.addr %s313, 8
        %s315 = smul.addr %s314, 4
        %s316 = scalar_lea.vmem %s0, %s315
        %p317 = pneg %p46
        %p318 = pneg %p43
        %s319 = smul.u32 16, %s25
        %p320 = scmp.lt.s32.totalorder %s319, 63
        %s321 = scalar_select %p320, %s319, 63
        %s322 = smul.addr %s321, 4
        %s323 = scalar_lea.vmem %s1, %s322
        %p324 = pneg %p72
        %p325 = pneg %p69
        %p326 = pneg %p93
        %p327 = pneg %p90
        %p328 = pneg %p114
        %p329 = pneg %p111
        %p330 = pneg %p135
        %p331 = pneg %p132
        %p332 = pneg %p156
        %p333 = pneg %p153
        %p334 = pneg %p177
        %p335 = pneg %p174
        %p336 = pneg %p198
        %p337 = pneg %p195
        %p338 = pneg %p219
        %p339 = pneg %p216
        %p340 = pneg %p245
        %p341 = pneg %p242
        %s342 = sand.u32 %s232, 1
        %s343 = scalar_lea.sflag [#allocation4], %s342
        %s344 = sand.u32 %s232, 1
        %s345 = scalar_lea.vmem [#allocation3], %s344
        %s346 = smul.u32 16, %s25
        %p347 = scmp.lt.s32.totalorder %s346, 63
        %s348 = scalar_select %p347, %s346, 63
        %s349 = smul.addr %s348, 8
        %s350 = smul.addr %s349, 4
        %s351 = scalar_lea.vmem %s0, %s350
        %s352 = smul.u32 16, %s25
        %s353 = smul.u32 16, %s25
        %p354 = scmp.lt.s32.totalorder %s353, 63
        %s355 = scalar_select %p354, %s353, 63
        %s356 = smul.addr %s355, 4
        %s357 = scalar_lea.vmem %s1, %s356
        %s358 = smul.u32 16, %s25
        %v360 = vld [vmem:[%s351] sm:$0xff]
        %v361 = vld [vmem:[%s351 + $0x8] sm:$0xff]
        %v362 = vld [vmem:[%s351 + $0x10] sm:$0xff]
        %v363 = vld [vmem:[%s351 + $0x18] sm:$0xff]
        %v364 = vld [vmem:[%s351 + $0x20] sm:$0xff]
        %v365 = vld [vmem:[%s351 + $0x28] sm:$0xff]
        %v366 = vld [vmem:[%s351 + $0x30] sm:$0xff]
        %v367 = vld [vmem:[%s351 + $0x38] sm:$0xff]
        %v368 = vld [vmem:[%s351 + $0x40] sm:$0xff]
        %v369 = vld [vmem:[%s351 + $0x48] sm:$0xff]
        %v370 = vld [vmem:[%s351 + $0x50] sm:$0xff]
        %v371 = vld [vmem:[%s351 + $0x58] sm:$0xff]
        %v372 = vld [vmem:[%s351 + $0x60] sm:$0xff]
        %v373 = vld [vmem:[%s351 + $0x68] sm:$0xff]
        %v374 = vld [vmem:[%s351 + $0x70] sm:$0xff]
        %v375 = vld [vmem:[%s351 + $0x78] sm:$0xff]
        %v376 = vld [vmem:[%s351 + $0x80] sm:$0xff]
        %v377 = vld [vmem:[%s351 + $0x88] sm:$0xff]
        %v378 = vld [vmem:[%s351 + $0x90] sm:$0xff]
        %v379 = vld [vmem:[%s351 + $0x98] sm:$0xff]
        %v380 = vld [vmem:[%s351 + $0xa0] sm:$0xff]
        %v381 = vld [vmem:[%s351 + $0xa8] sm:$0xff]
        %v382 = vld [vmem:[%s351 + $0xb0] sm:$0xff]
        %v383 = vld [vmem:[%s351 + $0xb8] sm:$0xff]
        %v384 = vld [vmem:[%s351 + $0xc0] sm:$0xff]
        %v385 = vld [vmem:[%s351 + $0xc8] sm:$0xff]
        %v386 = vld [vmem:[%s351 + $0xd0] sm:$0xff]
        %v387 = vld [vmem:[%s351 + $0xd8] sm:$0xff]
        %v388 = vld [vmem:[%s351 + $0xe0] sm:$0xff]
        %v389 = vld [vmem:[%s351 + $0xe8] sm:$0xff]
        %v390 = vld [vmem:[%s351 + $0xf0] sm:$0xff]
        %v391 = vld [vmem:[%s351 + $0xf8] sm:$0xff]
        %v392 = vld [vmem:[%s351 + $0x100] sm:$0xff]
        %v393 = vld [vmem:[%s351 + $0x108] sm:$0xff]
        %v394 = vld [vmem:[%s351 + $0x110] sm:$0xff]
        %v395 = vld [vmem:[%s351 + $0x118] sm:$0xff]
        %v396 = vld [vmem:[%s351 + $0x120] sm:$0xff]
        %v397 = vld [vmem:[%s351 + $0x128] sm:$0xff]
        %v398 = vld [vmem:[%s351 + $0x130] sm:$0xff]
        %v399 = vld [vmem:[%s351 + $0x138] sm:$0xff]
        %v400 = vld [vmem:[%s351 + $0x140] sm:$0xff]
        %v401 = vld [vmem:[%s351 + $0x148] sm:$0xff]
        %v402 = vld [vmem:[%s351 + $0x150] sm:$0xff]
        %v403 = vld [vmem:[%s351 + $0x158] sm:$0xff]
        %v404 = vld [vmem:[%s351 + $0x160] sm:$0xff]
        %v405 = vld [vmem:[%s351 + $0x168] sm:$0xff]
        %v406 = vld [vmem:[%s351 + $0x170] sm:$0xff]
        %v407 = vld [vmem:[%s351 + $0x178] sm:$0xff]
        %v408 = vld [vmem:[%s351 + $0x180] sm:$0xff]
        %v409 = vld [vmem:[%s351 + $0x188] sm:$0xff]
        %v410 = vld [vmem:[%s351 + $0x190] sm:$0xff]
        %v411 = vld [vmem:[%s351 + $0x198] sm:$0xff]
        %v412 = vld [vmem:[%s351 + $0x1a0] sm:$0xff]
        %v413 = vld [vmem:[%s351 + $0x1a8] sm:$0xff]
        %v414 = vld [vmem:[%s351 + $0x1b0] sm:$0xff]
        %v415 = vld [vmem:[%s351 + $0x1b8] sm:$0xff]
        %v416 = vld [vmem:[%s351 + $0x1c0] sm:$0xff]
        %v417 = vld [vmem:[%s351 + $0x1c8] sm:$0xff]
        %v418 = vld [vmem:[%s351 + $0x1d0] sm:$0xff]
        %v419 = vld [vmem:[%s351 + $0x1d8] sm:$0xff]
        %v420 = vld [vmem:[%s351 + $0x1e0] sm:$0xff]
        %v421 = vld [vmem:[%s351 + $0x1e8] sm:$0xff]
        %v422 = vld [vmem:[%s351 + $0x1f0] sm:$0xff]
        %v423 = vld [vmem:[%s351 + $0x1f8] sm:$0xff]
        %v424 = vld [vmem:[%s2] sm:$0xf]
        %v425 = vld [vmem:[%s2 + $0x4] sm:$0xf]
        %v426 = vld [vmem:[%s2 + $0x8] sm:$0xf]
        %v427 = vld [vmem:[%s2 + $0xc] sm:$0xf]
        %v428 = vld [vmem:[%s2 + $0x10] sm:$0xf]
        %v429 = vld [vmem:[%s2 + $0x14] sm:$0xf]
        %v430 = vld [vmem:[%s2 + $0x18] sm:$0xf]
        %v431 = vld [vmem:[%s2 + $0x1c] sm:$0xf]
        %v432 = vld [vmem:[%s2 + $0x20] sm:$0xf]
        %v433 = vld [vmem:[%s2 + $0x24] sm:$0xf]
        %v434 = vld [vmem:[%s2 + $0x28] sm:$0xf]
        %v435 = vld [vmem:[%s2 + $0x2c] sm:$0xf]
        %v436 = vld [vmem:[%s2 + $0x30] sm:$0xf]
        %v437 = vld [vmem:[%s2 + $0x34] sm:$0xf]
        %v438 = vld [vmem:[%s2 + $0x38] sm:$0xf]
        %v439 = vld [vmem:[%s2 + $0x3c] sm:$0xf]
        %v440 = vld [vmem:[%s2 + $0x40] sm:$0xf]
        %v441 = vld [vmem:[%s2 + $0x44] sm:$0xf]
        %v442 = vld [vmem:[%s2 + $0x48] sm:$0xf]
        %v443 = vld [vmem:[%s2 + $0x4c] sm:$0xf]
        %v444 = vld [vmem:[%s2 + $0x50] sm:$0xf]
        %v445 = vld [vmem:[%s2 + $0x54] sm:$0xf]
        %v446 = vld [vmem:[%s2 + $0x58] sm:$0xf]
        %v447 = vld [vmem:[%s2 + $0x5c] sm:$0xf]
        %v448 = vld [vmem:[%s2 + $0x60] sm:$0xf]
        %v449 = vld [vmem:[%s2 + $0x64] sm:$0xf]
        %v450 = vld [vmem:[%s2 + $0x68] sm:$0xf]
        %v451 = vld [vmem:[%s2 + $0x6c] sm:$0xf]
        %v452 = vld [vmem:[%s2 + $0x70] sm:$0xf]
        %v453 = vld [vmem:[%s2 + $0x74] sm:$0xf]
        %v454 = vld [vmem:[%s2 + $0x78] sm:$0xf]
        %v455 = vld [vmem:[%s2 + $0x7c] sm:$0xf]
        %v456 = vld [vmem:[%s2 + $0x80] sm:$0xf]
        %v457 = vld [vmem:[%s2 + $0x84] sm:$0xf]
        %v458 = vld [vmem:[%s2 + $0x88] sm:$0xf]
        %v459 = vld [vmem:[%s2 + $0x8c] sm:$0xf]
        %v460 = vld [vmem:[%s2 + $0x90] sm:$0xf]
        %v461 = vld [vmem:[%s2 + $0x94] sm:$0xf]
        %v462 = vld [vmem:[%s2 + $0x98] sm:$0xf]
        %v463 = vld [vmem:[%s2 + $0x9c] sm:$0xf]
        %v464 = vld [vmem:[%s2 + $0xa0] sm:$0xf]
        %v465 = vld [vmem:[%s2 + $0xa4] sm:$0xf]
        %v466 = vld [vmem:[%s2 + $0xa8] sm:$0xf]
        %v467 = vld [vmem:[%s2 + $0xac] sm:$0xf]
        %v468 = vld [vmem:[%s2 + $0xb0] sm:$0xf]
        %v469 = vld [vmem:[%s2 + $0xb4] sm:$0xf]
        %v470 = vld [vmem:[%s2 + $0xb8] sm:$0xf]
        %v471 = vld [vmem:[%s2 + $0xbc] sm:$0xf]
        %v472 = vld [vmem:[%s2 + $0xc0] sm:$0xf]
        %v473 = vld [vmem:[%s2 + $0xc4] sm:$0xf]
        %v474 = vld [vmem:[%s2 + $0xc8] sm:$0xf]
        %v475 = vld [vmem:[%s2 + $0xcc] sm:$0xf]
        %v476 = vld [vmem:[%s2 + $0xd0] sm:$0xf]
        %v477 = vld [vmem:[%s2 + $0xd4] sm:$0xf]
        %v478 = vld [vmem:[%s2 + $0xd8] sm:$0xf]
        %v479 = vld [vmem:[%s2 + $0xdc] sm:$0xf]
        %v480 = vld [vmem:[%s2 + $0xe0] sm:$0xf]
        %v481 = vld [vmem:[%s2 + $0xe4] sm:$0xf]
        %v482 = vld [vmem:[%s2 + $0xe8] sm:$0xf]
        %v483 = vld [vmem:[%s2 + $0xec] sm:$0xf]
        %v484 = vld [vmem:[%s2 + $0xf0] sm:$0xf]
        %v485 = vld [vmem:[%s2 + $0xf4] sm:$0xf]
        %v486 = vld [vmem:[%s2 + $0xf8] sm:$0xf]
        %v487 = vld [vmem:[%s2 + $0xfc] sm:$0xf]
        %v488 = vld [vmem:[%s2 + $0x100] sm:$0xf]
        %v489 = vld [vmem:[%s2 + $0x104] sm:$0xf]
        %v490 = vld [vmem:[%s2 + $0x108] sm:$0xf]
        %v491 = vld [vmem:[%s2 + $0x10c] sm:$0xf]
        %v492 = vld [vmem:[%s2 + $0x110] sm:$0xf]
        %v493 = vld [vmem:[%s2 + $0x114] sm:$0xf]
        %v494 = vld [vmem:[%s2 + $0x118] sm:$0xf]
        %v495 = vld [vmem:[%s2 + $0x11c] sm:$0xf]
        %v496 = vld [vmem:[%s2 + $0x120] sm:$0xf]
        %v497 = vld [vmem:[%s2 + $0x124] sm:$0xf]
        %v498 = vld [vmem:[%s2 + $0x128] sm:$0xf]
        %v499 = vld [vmem:[%s2 + $0x12c] sm:$0xf]
        %v500 = vld [vmem:[%s2 + $0x130] sm:$0xf]
        %v501 = vld [vmem:[%s2 + $0x134] sm:$0xf]
        %v502 = vld [vmem:[%s2 + $0x138] sm:$0xf]
        %v503 = vld [vmem:[%s2 + $0x13c] sm:$0xf]
        %v504 = vld [vmem:[%s2 + $0x140] sm:$0xf]
        %v505 = vld [vmem:[%s2 + $0x144] sm:$0xf]
        %v506 = vld [vmem:[%s2 + $0x148] sm:$0xf]
        %v507 = vld [vmem:[%s2 + $0x14c] sm:$0xf]
        %v508 = vld [vmem:[%s2 + $0x150] sm:$0xf]
        %v509 = vld [vmem:[%s2 + $0x154] sm:$0xf]
        %v510 = vld [vmem:[%s2 + $0x158] sm:$0xf]
        %v511 = vld [vmem:[%s2 + $0x15c] sm:$0xf]
        %v512 = vld [vmem:[%s2 + $0x160] sm:$0xf]
        %v513 = vld [vmem:[%s2 + $0x164] sm:$0xf]
        %v514 = vld [vmem:[%s2 + $0x168] sm:$0xf]
        %v515 = vld [vmem:[%s2 + $0x16c] sm:$0xf]
        %v516 = vld [vmem:[%s2 + $0x170] sm:$0xf]
        %v517 = vld [vmem:[%s2 + $0x174] sm:$0xf]
        %v518 = vld [vmem:[%s2 + $0x178] sm:$0xf]
        %v519 = vld [vmem:[%s2 + $0x17c] sm:$0xf]
        %v520 = vld [vmem:[%s2 + $0x180] sm:$0xf]
        %v521 = vld [vmem:[%s2 + $0x184] sm:$0xf]
        %v522 = vld [vmem:[%s2 + $0x188] sm:$0xf]
        %v523 = vld [vmem:[%s2 + $0x18c] sm:$0xf]
        %v524 = vld [vmem:[%s2 + $0x190] sm:$0xf]
        %v525 = vld [vmem:[%s2 + $0x194] sm:$0xf]
        %v526 = vld [vmem:[%s2 + $0x198] sm:$0xf]
        %v527 = vld [vmem:[%s2 + $0x19c] sm:$0xf]
        %v528 = vld [vmem:[%s2 + $0x1a0] sm:$0xf]
        %v529 = vld [vmem:[%s2 + $0x1a4] sm:$0xf]
        %v530 = vld [vmem:[%s2 + $0x1a8] sm:$0xf]
        %v531 = vld [vmem:[%s2 + $0x1ac] sm:$0xf]
        %v532 = vld [vmem:[%s2 + $0x1b0] sm:$0xf]
        %v533 = vld [vmem:[%s2 + $0x1b4] sm:$0xf]
        %v534 = vld [vmem:[%s2 + $0x1b8] sm:$0xf]
        %v535 = vld [vmem:[%s2 + $0x1bc] sm:$0xf]
        %v536 = vld [vmem:[%s2 + $0x1c0] sm:$0xf]
        %v537 = vld [vmem:[%s2 + $0x1c4] sm:$0xf]
        %v538 = vld [vmem:[%s2 + $0x1c8] sm:$0xf]
        %v539 = vld [vmem:[%s2 + $0x1cc] sm:$0xf]
        %v540 = vld [vmem:[%s2 + $0x1d0] sm:$0xf]
        %v541 = vld [vmem:[%s2 + $0x1d4] sm:$0xf]
        %v542 = vld [vmem:[%s2 + $0x1d8] sm:$0xf]
        %v543 = vld [vmem:[%s2 + $0x1dc] sm:$0xf]
        %v544 = vld [vmem:[%s2 + $0x1e0] sm:$0xf]
        %v545 = vld [vmem:[%s2 + $0x1e4] sm:$0xf]
        %v546 = vld [vmem:[%s2 + $0x1e8] sm:$0xf]
        %v547 = vld [vmem:[%s2 + $0x1ec] sm:$0xf]
        %v548 = vld [vmem:[%s2 + $0x1f0] sm:$0xf]
        %v549 = vld [vmem:[%s2 + $0x1f4] sm:$0xf]
        %v550 = vld [vmem:[%s2 + $0x1f8] sm:$0xf]
        %v551 = vld [vmem:[%s2 + $0x1fc] sm:$0xf]
        %v552 = vld [vmem:[%s357] sm:$0xf]
        %v553 = vld [vmem:[%s357 + $0x4] sm:$0xf]
        %v554 = vld [vmem:[%s357 + $0x8] sm:$0xf]
        %v555 = vld [vmem:[%s357 + $0xc] sm:$0xf]
        %v556 = vld [vmem:[%s357 + $0x10] sm:$0xf]
        %v557 = vld [vmem:[%s357 + $0x14] sm:$0xf]
        %v558 = vld [vmem:[%s357 + $0x18] sm:$0xf]
        %v559 = vld [vmem:[%s357 + $0x1c] sm:$0xf]
        %v560 = vld [vmem:[%s357 + $0x20] sm:$0xf]
        %v561 = vld [vmem:[%s357 + $0x24] sm:$0xf]
        %v562 = vld [vmem:[%s357 + $0x28] sm:$0xf]
        %v563 = vld [vmem:[%s357 + $0x2c] sm:$0xf]
        %v564 = vld [vmem:[%s357 + $0x30] sm:$0xf]
        %v565 = vld [vmem:[%s357 + $0x34] sm:$0xf]
        %v566 = vld [vmem:[%s357 + $0x38] sm:$0xf]
        %v567 = vld [vmem:[%s357 + $0x3c] sm:$0xf]
        %v568 = vld [vmem:[%s3] sm:$0x3]
        %v585 = vunpack.c.l.b16 %v552
        %v586 = vunpack.c.l.b16 %v553
        %v587 = vunpack.c.l.b16 %v554
        %v588 = vunpack.c.l.b16 %v555
        %v589 = vunpack.c.l.b16 %v556
        %v590 = vunpack.c.l.b16 %v557
        %v591 = vunpack.c.l.b16 %v558
        %v592 = vunpack.c.l.b16 %v559
        %v593 = vunpack.c.l.b16 %v560
        %v594 = vunpack.c.l.b16 %v561
        %v595 = vunpack.c.l.b16 %v562
        %v596 = vunpack.c.l.b16 %v563
        %v597 = vunpack.c.l.b16 %v564
        %v598 = vunpack.c.l.b16 %v565
        %v599 = vunpack.c.l.b16 %v566
        %v600 = vunpack.c.l.b16 %v567
        %v601 = vpack.c.b16 %v586, %v585
        %v602 = vpack.c.b16 %v588, %v587
        %v603 = vpack.c.b16 %v590, %v589
        %v604 = vpack.c.b16 %v592, %v591
        %v605 = vpack.c.b16 %v594, %v593
        %v606 = vpack.c.b16 %v596, %v595
        %v607 = vpack.c.b16 %v598, %v597
        %v608 = vpack.c.b16 %v600, %v599
        %vm609 = vcmask 23552
        %v611 = vsel %vm609, %v601, 0
        %v614 = vsel %vm609, %v602, 0
        %v617 = vsel %vm609, %v603, 0
        %v620 = vsel %vm609, %v604, 0
        %v623 = vsel %vm609, %v605, 0
        %v626 = vsel %vm609, %v606, 0
        %v629 = vsel %vm609, %v607, 0
        %v632 = vsel %vm609, %v608, 0
        %vm634 = vcmask 1040384
        %vm635 = vcmask 1041408
        %v636 = vsel %vm634, 4294967295, 65535
        %v637 = vsel %vm635, %v636, 0
        %v639 = vand.u32 %v568, %v637
        %641 = vmatprep.subr.bf16.mxu0 0
        %642 = vmatpush1.bf16.msra.mxu0 0
        %643 = vmatprep.subr.bf16.mxu0 0
        %644 = vmatpush1.bf16.msra.mxu0 0
        %645 = vmatprep.subr.bf16.mxu0 0
        %646 = vmatpush1.bf16.msra.mxu0 0
        %647 = vmatprep.subr.bf16.mxu0 0
        %648 = vmatpush1.bf16.msra.mxu0 0
        %649 = vmatprep.subr.bf16.mxu0 0
        %650 = vmatpush1.bf16.msra.mxu0 0
        %651 = vmatprep.subr.bf16.mxu0 0
        %652 = vmatpush1.bf16.msra.mxu0 0
        %653 = vmatprep.subr.bf16.mxu0 0
        %654 = vmatpush1.bf16.msra.mxu0 0
        %655 = vmatprep.subr.bf16.mxu0 0
        %656 = vmatpush1.bf16.msra.mxu0 %v639
        %657 = vmatprep.subr.bf16.mxu0 0
        %658 = vmatpush2.bf16.msra.mxu0 0
        %659 = vmatprep.subr.bf16.mxu0 0
        %660 = vmatpush2.bf16.msra.mxu0 0
        %661 = vmatprep.subr.bf16.mxu0 0
        %662 = vmatpush2.bf16.msra.mxu0 0
        %663 = vmatprep.subr.bf16.mxu0 0
        %664 = vmatpush2.bf16.msra.mxu0 0
        %665 = vmatprep.subr.bf16.mxu0 0
        %666 = vmatpush2.bf16.msra.mxu0 0
        %667 = vmatprep.subr.bf16.mxu0 0
        %668 = vmatpush2.bf16.msra.mxu0 0
        %669 = vmatprep.subr.bf16.mxu0 0
        %670 = vmatpush2.bf16.msra.mxu0 0
        %671 = vmatprep.subr.bf16.mxu0 0
        %672 = vmatpush2.bf16.msra.mxu0 0
        %673 = vmatprep.mubr.bf16.mxu0 0
        %674 = vmatmul.mubr.bf16.gmra.mxu0 %v611
        %v675 = vpop.f32.mrf.mxu0
        %v676 = vadd.f32 0.0, %v675
        %v677 = vpop.f32.mrf.mxu0
        %v678 = vpop.f32.mrf.mxu0
        %v679 = vadd.f32 0.0, %v678
        %v680 = vpop.f32.mrf.mxu0
        %681 = vmatprep.mubr.bf16.mxu0 0
        %682 = vmatmul.mubr.bf16.gmra.mxu0 %v614
        %v683 = vpop.f32.mrf.mxu0
        %v684 = vadd.f32 0.0, %v683
        %v685 = vpop.f32.mrf.mxu0
        %v686 = vpop.f32.mrf.mxu0
        %v687 = vadd.f32 0.0, %v686
        %v688 = vpop.f32.mrf.mxu0
        %689 = vmatprep.mubr.bf16.mxu0 0
        %690 = vmatmul.mubr.bf16.gmra.mxu0 %v617
        %v691 = vpop.f32.mrf.mxu0
        %v692 = vadd.f32 0.0, %v691
        %v693 = vpop.f32.mrf.mxu0
        %v694 = vpop.f32.mrf.mxu0
        %v695 = vadd.f32 0.0, %v694
        %v696 = vpop.f32.mrf.mxu0
        %697 = vmatprep.mubr.bf16.mxu0 0
        %698 = vmatmul.mubr.bf16.gmra.mxu0 %v620
        %v699 = vpop.f32.mrf.mxu0
        %v700 = vadd.f32 0.0, %v699
        %v701 = vpop.f32.mrf.mxu0
        %v702 = vpop.f32.mrf.mxu0
        %v703 = vadd.f32 0.0, %v702
        %v704 = vpop.f32.mrf.mxu0
        %705 = vmatprep.mubr.bf16.mxu0 0
        %706 = vmatmul.mubr.bf16.gmra.mxu0 %v623
        %v707 = vpop.f32.mrf.mxu0
        %v708 = vadd.f32 0.0, %v707
        %v709 = vpop.f32.mrf.mxu0
        %v710 = vpop.f32.mrf.mxu0
        %v711 = vadd.f32 0.0, %v710
        %v712 = vpop.f32.mrf.mxu0
        %713 = vmatprep.mubr.bf16.mxu0 0
        %714 = vmatmul.mubr.bf16.gmra.mxu0 %v626
        %v715 = vpop.f32.mrf.mxu0
        %v716 = vadd.f32 0.0, %v715
        %v717 = vpop.f32.mrf.mxu0
        %v718 = vpop.f32.mrf.mxu0
        %v719 = vadd.f32 0.0, %v718
        %v720 = vpop.f32.mrf.mxu0
        %721 = vmatprep.mubr.bf16.mxu0 0
        %722 = vmatmul.mubr.bf16.gmra.mxu0 %v629
        %v723 = vpop.f32.mrf.mxu0
        %v724 = vadd.f32 0.0, %v723
        %v725 = vpop.f32.mrf.mxu0
        %v726 = vpop.f32.mrf.mxu0
        %v727 = vadd.f32 0.0, %v726
        %v728 = vpop.f32.mrf.mxu0
        %729 = vmatprep.mubr.bf16.mxu0 0
        %730 = vmatmul.mubr.bf16.gmra.mxu0 %v632
        %v731 = vpop.f32.mrf.mxu0
        %v732 = vadd.f32 0.0, %v731
        %v733 = vpop.f32.mrf.mxu0
        %v734 = vpop.f32.mrf.mxu0
        %v735 = vadd.f32 0.0, %v734
        %v736 = vpop.f32.mrf.mxu0
        %737 = vdwg.mxu0
        %v802 = vunpack.c.l.b16 %v360
        %v803 = vunpack.c.h.b16 %v360
        %v804 = vunpack.c.l.b16 %v361
        %v805 = vunpack.c.h.b16 %v361
        %v806 = vunpack.c.l.b16 %v362
        %v807 = vunpack.c.h.b16 %v362
        %v808 = vunpack.c.l.b16 %v363
        %v809 = vunpack.c.h.b16 %v363
        %v810 = vunpack.c.l.b16 %v364
        %v811 = vunpack.c.h.b16 %v364
        %v812 = vunpack.c.l.b16 %v365
        %v813 = vunpack.c.h.b16 %v365
        %v814 = vunpack.c.l.b16 %v366
        %v815 = vunpack.c.h.b16 %v366
        %v816 = vunpack.c.l.b16 %v367
        %v817 = vunpack.c.h.b16 %v367
        %v818 = vunpack.c.l.b16 %v368
        %v819 = vunpack.c.h.b16 %v368
        %v820 = vunpack.c.l.b16 %v369
        %v821 = vunpack.c.h.b16 %v369
        %v822 = vunpack.c.l.b16 %v370
        %v823 = vunpack.c.h.b16 %v370
        %v824 = vunpack.c.l.b16 %v371
        %v825 = vunpack.c.h.b16 %v371
        %v826 = vunpack.c.l.b16 %v372
        %v827 = vunpack.c.h.b16 %v372
        %v828 = vunpack.c.l.b16 %v373
        %v829 = vunpack.c.h.b16 %v373
        %v830 = vunpack.c.l.b16 %v374
        %v831 = vunpack.c.h.b16 %v374
        %v832 = vunpack.c.l.b16 %v375
        %v833 = vunpack.c.h.b16 %v375
        %v834 = vunpack.c.l.b16 %v376
        %v835 = vunpack.c.h.b16 %v376
        %v836 = vunpack.c.l.b16 %v377
        %v837 = vunpack.c.h.b16 %v377
        %v838 = vunpack.c.l.b16 %v378
        %v839 = vunpack.c.h.b16 %v378
        %v840 = vunpack.c.l.b16 %v379
        %v841 = vunpack.c.h.b16 %v379
        %v842 = vunpack.c.l.b16 %v380
        %v843 = vunpack.c.h.b16 %v380
        %v844 = vunpack.c.l.b16 %v381
        %v845 = vunpack.c.h.b16 %v381
        %v846 = vunpack.c.l.b16 %v382
        %v847 = vunpack.c.h.b16 %v382
        %v848 = vunpack.c.l.b16 %v383
        %v849 = vunpack.c.h.b16 %v383
        %v850 = vunpack.c.l.b16 %v384
        %v851 = vunpack.c.h.b16 %v384
        %v852 = vunpack.c.l.b16 %v385
        %v853 = vunpack.c.h.b16 %v385
        %v854 = vunpack.c.l.b16 %v386
        %v855 = vunpack.c.h.b16 %v386
        %v856 = vunpack.c.l.b16 %v387
        %v857 = vunpack.c.h.b16 %v387
        %v858 = vunpack.c.l.b16 %v388
        %v859 = vunpack.c.h.b16 %v388
        %v860 = vunpack.c.l.b16 %v389
        %v861 = vunpack.c.h.b16 %v389
        %v862 = vunpack.c.l.b16 %v390
        %v863 = vunpack.c.h.b16 %v390
        %v864 = vunpack.c.l.b16 %v391
        %v865 = vunpack.c.h.b16 %v391
        %v866 = vunpack.c.l.b16 %v392
        %v867 = vunpack.c.h.b16 %v392
        %v868 = vunpack.c.l.b16 %v393
        %v869 = vunpack.c.h.b16 %v393
        %v870 = vunpack.c.l.b16 %v394
        %v871 = vunpack.c.h.b16 %v394
        %v872 = vunpack.c.l.b16 %v395
        %v873 = vunpack.c.h.b16 %v395
        %v874 = vunpack.c.l.b16 %v396
        %v875 = vunpack.c.h.b16 %v396
        %v876 = vunpack.c.l.b16 %v397
        %v877 = vunpack.c.h.b16 %v397
        %v878 = vunpack.c.l.b16 %v398
        %v879 = vunpack.c.h.b16 %v398
        %v880 = vunpack.c.l.b16 %v399
        %v881 = vunpack.c.h.b16 %v399
        %v882 = vunpack.c.l.b16 %v400
        %v883 = vunpack.c.h.b16 %v400
        %v884 = vunpack.c.l.b16 %v401
        %v885 = vunpack.c.h.b16 %v401
        %v886 = vunpack.c.l.b16 %v402
        %v887 = vunpack.c.h.b16 %v402
        %v888 = vunpack.c.l.b16 %v403
        %v889 = vunpack.c.h.b16 %v403
        %v890 = vunpack.c.l.b16 %v404
        %v891 = vunpack.c.h.b16 %v404
        %v892 = vunpack.c.l.b16 %v405
        %v893 = vunpack.c.h.b16 %v405
        %v894 = vunpack.c.l.b16 %v406
        %v895 = vunpack.c.h.b16 %v406
        %v896 = vunpack.c.l.b16 %v407
        %v897 = vunpack.c.h.b16 %v407
        %v898 = vunpack.c.l.b16 %v408
        %v899 = vunpack.c.h.b16 %v408
        %v900 = vunpack.c.l.b16 %v409
        %v901 = vunpack.c.h.b16 %v409
        %v902 = vunpack.c.l.b16 %v410
        %v903 = vunpack.c.h.b16 %v410
        %v904 = vunpack.c.l.b16 %v411
        %v905 = vunpack.c.h.b16 %v411
        %v906 = vunpack.c.l.b16 %v412
        %v907 = vunpack.c.h.b16 %v412
        %v908 = vunpack.c.l.b16 %v413
        %v909 = vunpack.c.h.b16 %v413
        %v910 = vunpack.c.l.b16 %v414
        %v911 = vunpack.c.h.b16 %v414
        %v912 = vunpack.c.l.b16 %v415
        %v913 = vunpack.c.h.b16 %v415
        %v914 = vunpack.c.l.b16 %v416
        %v915 = vunpack.c.h.b16 %v416
        %v916 = vunpack.c.l.b16 %v417
        %v917 = vunpack.c.h.b16 %v417
        %v918 = vunpack.c.l.b16 %v418
        %v919 = vunpack.c.h.b16 %v418
        %v920 = vunpack.c.l.b16 %v419
        %v921 = vunpack.c.h.b16 %v419
        %v922 = vunpack.c.l.b16 %v420
        %v923 = vunpack.c.h.b16 %v420
        %v924 = vunpack.c.l.b16 %v421
        %v925 = vunpack.c.h.b16 %v421
        %v926 = vunpack.c.l.b16 %v422
        %v927 = vunpack.c.h.b16 %v422
        %v928 = vunpack.c.l.b16 %v423
        %v929 = vunpack.c.h.b16 %v423
        %v930 = vpack.c.b16 %v810, %v802
        %v931 = vpack.c.b16 %v811, %v803
        %v932 = vpack.c.b16 %v812, %v804
        %v933 = vpack.c.b16 %v813, %v805
        %v934 = vpack.c.b16 %v814, %v806
        %v935 = vpack.c.b16 %v815, %v807
        %v936 = vpack.c.b16 %v816, %v808
        %v937 = vpack.c.b16 %v817, %v809
        %v938 = vpack.c.b16 %v826, %v818
        %v939 = vpack.c.b16 %v827, %v819
        %v940 = vpack.c.b16 %v828, %v820
        %v941 = vpack.c.b16 %v829, %v821
        %v942 = vpack.c.b16 %v830, %v822
        %v943 = vpack.c.b16 %v831, %v823
        %v944 = vpack.c.b16 %v832, %v824
        %v945 = vpack.c.b16 %v833, %v825
        %v946 = vpack.c.b16 %v842, %v834
        %v947 = vpack.c.b16 %v843, %v835
        %v948 = vpack.c.b16 %v844, %v836
        %v949 = vpack.c.b16 %v845, %v837
        %v950 = vpack.c.b16 %v846, %v838
        %v951 = vpack.c.b16 %v847, %v839
        %v952 = vpack.c.b16 %v848, %v840
        %v953 = vpack.c.b16 %v849, %v841
        %v954 = vpack.c.b16 %v858, %v850
        %v955 = vpack.c.b16 %v859, %v851
        %v956 = vpack.c.b16 %v860, %v852
        %v957 = vpack.c.b16 %v861, %v853
        %v958 = vpack.c.b16 %v862, %v854
        %v959 = vpack.c.b16 %v863, %v855
        %v960 = vpack.c.b16 %v864, %v856
        %v961 = vpack.c.b16 %v865, %v857
        %v962 = vpack.c.b16 %v874, %v866
        %v963 = vpack.c.b16 %v875, %v867
        %v964 = vpack.c.b16 %v876, %v868
        %v965 = vpack.c.b16 %v877, %v869
        %v966 = vpack.c.b16 %v878, %v870
        %v967 = vpack.c.b16 %v879, %v871
        %v968 = vpack.c.b16 %v880, %v872
        %v969 = vpack.c.b16 %v881, %v873
        %v970 = vpack.c.b16 %v890, %v882
        %v971 = vpack.c.b16 %v891, %v883
        %v972 = vpack.c.b16 %v892, %v884
        %v973 = vpack.c.b16 %v893, %v885
        %v974 = vpack.c.b16 %v894, %v886
        %v975 = vpack.c.b16 %v895, %v887
        %v976 = vpack.c.b16 %v896, %v888
        %v977 = vpack.c.b16 %v897, %v889
        %v978 = vpack.c.b16 %v906, %v898
        %v979 = vpack.c.b16 %v907, %v899
        %v980 = vpack.c.b16 %v908, %v900
        %v981 = vpack.c.b16 %v909, %v901
        %v982 = vpack.c.b16 %v910, %v902
        %v983 = vpack.c.b16 %v911, %v903
        %v984 = vpack.c.b16 %v912, %v904
        %v985 = vpack.c.b16 %v913, %v905
        %v986 = vpack.c.b16 %v922, %v914
        %v987 = vpack.c.b16 %v923, %v915
        %v988 = vpack.c.b16 %v924, %v916
        %v989 = vpack.c.b16 %v925, %v917
        %v990 = vpack.c.b16 %v926, %v918
        %v991 = vpack.c.b16 %v927, %v919
        %v992 = vpack.c.b16 %v928, %v920
        %v993 = vpack.c.b16 %v929, %v921
        %v1186 = vunpack.c.l.b16 %v424
        %v1187 = vunpack.c.l.b16 %v425
        %v1188 = vunpack.c.l.b16 %v426
        %v1189 = vunpack.c.l.b16 %v427
        %v1190 = vunpack.c.l.b16 %v428
        %v1191 = vunpack.c.l.b16 %v429
        %v1192 = vunpack.c.l.b16 %v430
        %v1193 = vunpack.c.l.b16 %v431
        %v1194 = vunpack.c.l.b16 %v432
        %v1195 = vunpack.c.l.b16 %v433
        %v1196 = vunpack.c.l.b16 %v434
        %v1197 = vunpack.c.l.b16 %v435
        %v1198 = vunpack.c.l.b16 %v436
        %v1199 = vunpack.c.l.b16 %v437
        %v1200 = vunpack.c.l.b16 %v438
        %v1201 = vunpack.c.l.b16 %v439
        %v1202 = vunpack.c.l.b16 %v440
        %v1203 = vunpack.c.l.b16 %v441
        %v1204 = vunpack.c.l.b16 %v442
        %v1205 = vunpack.c.l.b16 %v443
        %v1206 = vunpack.c.l.b16 %v444
        %v1207 = vunpack.c.l.b16 %v445
        %v1208 = vunpack.c.l.b16 %v446
        %v1209 = vunpack.c.l.b16 %v447
        %v1210 = vunpack.c.l.b16 %v448
        %v1211 = vunpack.c.l.b16 %v449
        %v1212 = vunpack.c.l.b16 %v450
        %v1213 = vunpack.c.l.b16 %v451
        %v1214 = vunpack.c.l.b16 %v452
        %v1215 = vunpack.c.l.b16 %v453
        %v1216 = vunpack.c.l.b16 %v454
        %v1217 = vunpack.c.l.b16 %v455
        %v1218 = vunpack.c.l.b16 %v456
        %v1219 = vunpack.c.l.b16 %v457
        %v1220 = vunpack.c.l.b16 %v458
        %v1221 = vunpack.c.l.b16 %v459
        %v1222 = vunpack.c.l.b16 %v460
        %v1223 = vunpack.c.l.b16 %v461
        %v1224 = vunpack.c.l.b16 %v462
        %v1225 = vunpack.c.l.b16 %v463
        %v1226 = vunpack.c.l.b16 %v464
        %v1227 = vunpack.c.l.b16 %v465
        %v1228 = vunpack.c.l.b16 %v466
        %v1229 = vunpack.c.l.b16 %v467
        %v1230 = vunpack.c.l.b16 %v468
        %v1231 = vunpack.c.l.b16 %v469
        %v1232 = vunpack.c.l.b16 %v470
        %v1233 = vunpack.c.l.b16 %v471
        %v1234 = vunpack.c.l.b16 %v472
        %v1235 = vunpack.c.l.b16 %v473
        %v1236 = vunpack.c.l.b16 %v474
        %v1237 = vunpack.c.l.b16 %v475
        %v1238 = vunpack.c.l.b16 %v476
        %v1239 = vunpack.c.l.b16 %v477
        %v1240 = vunpack.c.l.b16 %v478
        %v1241 = vunpack.c.l.b16 %v479
        %v1242 = vunpack.c.l.b16 %v480
        %v1243 = vunpack.c.l.b16 %v481
        %v1244 = vunpack.c.l.b16 %v482
        %v1245 = vunpack.c.l.b16 %v483
        %v1246 = vunpack.c.l.b16 %v484
        %v1247 = vunpack.c.l.b16 %v485
        %v1248 = vunpack.c.l.b16 %v486
        %v1249 = vunpack.c.l.b16 %v487
        %v1250 = vunpack.c.l.b16 %v488
        %v1251 = vunpack.c.l.b16 %v489
        %v1252 = vunpack.c.l.b16 %v490
        %v1253 = vunpack.c.l.b16 %v491
        %v1254 = vunpack.c.l.b16 %v492
        %v1255 = vunpack.c.l.b16 %v493
        %v1256 = vunpack.c.l.b16 %v494
        %v1257 = vunpack.c.l.b16 %v495
        %v1258 = vunpack.c.l.b16 %v496
        %v1259 = vunpack.c.l.b16 %v497
        %v1260 = vunpack.c.l.b16 %v498
        %v1261 = vunpack.c.l.b16 %v499
        %v1262 = vunpack.c.l.b16 %v500
        %v1263 = vunpack.c.l.b16 %v501
        %v1264 = vunpack.c.l.b16 %v502
        %v1265 = vunpack.c.l.b16 %v503
        %v1266 = vunpack.c.l.b16 %v504
        %v1267 = vunpack.c.l.b16 %v505
        %v1268 = vunpack.c.l.b16 %v506
        %v1269 = vunpack.c.l.b16 %v507
        %v1270 = vunpack.c.l.b16 %v508
        %v1271 = vunpack.c.l.b16 %v509
        %v1272 = vunpack.c.l.b16 %v510
        %v1273 = vunpack.c.l.b16 %v511
        %v1274 = vunpack.c.l.b16 %v512
        %v1275 = vunpack.c.l.b16 %v513
        %v1276 = vunpack.c.l.b16 %v514
        %v1277 = vunpack.c.l.b16 %v515
        %v1278 = vunpack.c.l.b16 %v516
        %v1279 = vunpack.c.l.b16 %v517
        %v1280 = vunpack.c.l.b16 %v518
        %v1281 = vunpack.c.l.b16 %v519
        %v1282 = vunpack.c.l.b16 %v520
        %v1283 = vunpack.c.l.b16 %v521
        %v1284 = vunpack.c.l.b16 %v522
        %v1285 = vunpack.c.l.b16 %v523
        %v1286 = vunpack.c.l.b16 %v524
        %v1287 = vunpack.c.l.b16 %v525
        %v1288 = vunpack.c.l.b16 %v526
        %v1289 = vunpack.c.l.b16 %v527
        %v1290 = vunpack.c.l.b16 %v528
        %v1291 = vunpack.c.l.b16 %v529
        %v1292 = vunpack.c.l.b16 %v530
        %v1293 = vunpack.c.l.b16 %v531
        %v1294 = vunpack.c.l.b16 %v532
        %v1295 = vunpack.c.l.b16 %v533
        %v1296 = vunpack.c.l.b16 %v534
        %v1297 = vunpack.c.l.b16 %v535
        %v1298 = vunpack.c.l.b16 %v536
        %v1299 = vunpack.c.l.b16 %v537
        %v1300 = vunpack.c.l.b16 %v538
        %v1301 = vunpack.c.l.b16 %v539
        %v1302 = vunpack.c.l.b16 %v540
        %v1303 = vunpack.c.l.b16 %v541
        %v1304 = vunpack.c.l.b16 %v542
        %v1305 = vunpack.c.l.b16 %v543
        %v1306 = vunpack.c.l.b16 %v544
        %v1307 = vunpack.c.l.b16 %v545
        %v1308 = vunpack.c.l.b16 %v546
        %v1309 = vunpack.c.l.b16 %v547
        %v1310 = vunpack.c.l.b16 %v548
        %v1311 = vunpack.c.l.b16 %v549
        %v1312 = vunpack.c.l.b16 %v550
        %v1313 = vunpack.c.l.b16 %v551
        %v1314 = vpack.c.b16 %v1187, %v1186
        %v1315 = vpack.c.b16 %v1189, %v1188
        %v1316 = vpack.c.b16 %v1191, %v1190
        %v1317 = vpack.c.b16 %v1193, %v1192
        %v1318 = vpack.c.b16 %v1195, %v1194
        %v1319 = vpack.c.b16 %v1197, %v1196
        %v1320 = vpack.c.b16 %v1199, %v1198
        %v1321 = vpack.c.b16 %v1201, %v1200
        %v1322 = vpack.c.b16 %v1203, %v1202
        %v1323 = vpack.c.b16 %v1205, %v1204
        %v1324 = vpack.c.b16 %v1207, %v1206
        %v1325 = vpack.c.b16 %v1209, %v1208
        %v1326 = vpack.c.b16 %v1211, %v1210
        %v1327 = vpack.c.b16 %v1213, %v1212
        %v1328 = vpack.c.b16 %v1215, %v1214
        %v1329 = vpack.c.b16 %v1217, %v1216
        %v1330 = vpack.c.b16 %v1219, %v1218
        %v1331 = vpack.c.b16 %v1221, %v1220
        %v1332 = vpack.c.b16 %v1223, %v1222
        %v1333 = vpack.c.b16 %v1225, %v1224
        %v1334 = vpack.c.b16 %v1227, %v1226
        %v1335 = vpack.c.b16 %v1229, %v1228
        %v1336 = vpack.c.b16 %v1231, %v1230
        %v1337 = vpack.c.b16 %v1233, %v1232
        %v1338 = vpack.c.b16 %v1235, %v1234
        %v1339 = vpack.c.b16 %v1237, %v1236
        %v1340 = vpack.c.b16 %v1239, %v1238
        %v1341 = vpack.c.b16 %v1241, %v1240
        %v1342 = vpack.c.b16 %v1243, %v1242
        %v1343 = vpack.c.b16 %v1245, %v1244
        %v1344 = vpack.c.b16 %v1247, %v1246
        %v1345 = vpack.c.b16 %v1249, %v1248
        %v1346 = vpack.c.b16 %v1251, %v1250
        %v1347 = vpack.c.b16 %v1253, %v1252
        %v1348 = vpack.c.b16 %v1255, %v1254
        %v1349 = vpack.c.b16 %v1257, %v1256
        %v1350 = vpack.c.b16 %v1259, %v1258
        %v1351 = vpack.c.b16 %v1261, %v1260
        %v1352 = vpack.c.b16 %v1263, %v1262
        %v1353 = vpack.c.b16 %v1265, %v1264
        %v1354 = vpack.c.b16 %v1267, %v1266
        %v1355 = vpack.c.b16 %v1269, %v1268
        %v1356 = vpack.c.b16 %v1271, %v1270
        %v1357 = vpack.c.b16 %v1273, %v1272
        %v1358 = vpack.c.b16 %v1275, %v1274
        %v1359 = vpack.c.b16 %v1277, %v1276
        %v1360 = vpack.c.b16 %v1279, %v1278
        %v1361 = vpack.c.b16 %v1281, %v1280
        %v1362 = vpack.c.b16 %v1283, %v1282
        %v1363 = vpack.c.b16 %v1285, %v1284
        %v1364 = vpack.c.b16 %v1287, %v1286
        %v1365 = vpack.c.b16 %v1289, %v1288
        %v1366 = vpack.c.b16 %v1291, %v1290
        %v1367 = vpack.c.b16 %v1293, %v1292
        %v1368 = vpack.c.b16 %v1295, %v1294
        %v1369 = vpack.c.b16 %v1297, %v1296
        %v1370 = vpack.c.b16 %v1299, %v1298
        %v1371 = vpack.c.b16 %v1301, %v1300
        %v1372 = vpack.c.b16 %v1303, %v1302
        %v1373 = vpack.c.b16 %v1305, %v1304
        %v1374 = vpack.c.b16 %v1307, %v1306
        %v1375 = vpack.c.b16 %v1309, %v1308
        %v1376 = vpack.c.b16 %v1311, %v1310
        %v1377 = vpack.c.b16 %v1313, %v1312
        %1442 = vmatprep.subr.bf16.mxu0 0
        %1443 = vmatpush1.bf16.msra.mxu0 %v1321
        %1444 = vmatprep.subr.bf16.mxu0 0
        %1445 = vmatpush1.bf16.msra.mxu0 %v1320
        %1446 = vmatprep.subr.bf16.mxu0 0
        %1447 = vmatpush1.bf16.msra.mxu0 %v1319
        %1448 = vmatprep.subr.bf16.mxu0 0
        %1449 = vmatpush1.bf16.msra.mxu0 %v1318
        %1450 = vmatprep.subr.bf16.mxu0 0
        %1451 = vmatpush1.bf16.msra.mxu0 %v1317
        %1452 = vmatprep.subr.bf16.mxu0 0
        %1453 = vmatpush1.bf16.msra.mxu0 %v1316
        %1454 = vmatprep.subr.bf16.mxu0 0
        %1455 = vmatpush1.bf16.msra.mxu0 %v1315
        %1456 = vmatprep.subr.bf16.mxu0 0
        %1457 = vmatpush1.bf16.msra.mxu0 %v1314
        %1458 = vmatprep.subr.bf16.mxu0 0
        %1459 = vmatpush2.bf16.msra.mxu0 %v1329
        %1460 = vmatprep.subr.bf16.mxu0 0
        %1461 = vmatpush2.bf16.msra.mxu0 %v1328
        %1462 = vmatprep.subr.bf16.mxu0 0
        %1463 = vmatpush2.bf16.msra.mxu0 %v1327
        %1464 = vmatprep.subr.bf16.mxu0 0
        %1465 = vmatpush2.bf16.msra.mxu0 %v1326
        %1466 = vmatprep.subr.bf16.mxu0 0
        %1467 = vmatpush2.bf16.msra.mxu0 %v1325
        %1468 = vmatprep.subr.bf16.mxu0 0
        %1469 = vmatpush2.bf16.msra.mxu0 %v1324
        %1470 = vmatprep.subr.bf16.mxu0 0
        %1471 = vmatpush2.bf16.msra.mxu0 %v1323
        %1472 = vmatprep.subr.bf16.mxu0 0
        %1473 = vmatpush2.bf16.msra.mxu0 %v1322
        %1474 = vmatprep.mubr.bf16.mxu0 %v931
        %1475 = vmatmul.mubr.bf16.gmra.mxu0 %v930
        %v1476 = vpop.f32.mrf.mxu0
        %v1477 = vadd.f32 %v676, %v1476
        %v1478 = vpop.f32.mrf.mxu0
        %v1479 = vpop.f32.mrf.mxu0
        %v1480 = vadd.f32 %v679, %v1479
        %v1481 = vpop.f32.mrf.mxu0
        %1482 = vmatprep.mubr.bf16.mxu0 %v939
        %1483 = vmatmul.mubr.bf16.gmra.mxu0 %v938
        %v1484 = vpop.f32.mrf.mxu0
        %v1485 = vadd.f32 %v684, %v1484
        %v1486 = vpop.f32.mrf.mxu0
        %v1487 = vpop.f32.mrf.mxu0
        %v1488 = vadd.f32 %v687, %v1487
        %v1489 = vpop.f32.mrf.mxu0
        %1490 = vmatprep.mubr.bf16.mxu0 %v947
        %1491 = vmatmul.mubr.bf16.gmra.mxu0 %v946
        %v1492 = vpop.f32.mrf.mxu0
        %v1493 = vadd.f32 %v692, %v1492
        %v1494 = vpop.f32.mrf.mxu0
        %v1495 = vpop.f32.mrf.mxu0
        %v1496 = vadd.f32 %v695, %v1495
        %v1497 = vpop.f32.mrf.mxu0
        %1498 = vmatprep.mubr.bf16.mxu0 %v955
        %1499 = vmatmul.mubr.bf16.gmra.mxu0 %v954
        %v1500 = vpop.f32.mrf.mxu0
        %v1501 = vadd.f32 %v700, %v1500
        %v1502 = vpop.f32.mrf.mxu0
        %v1503 = vpop.f32.mrf.mxu0
        %v1504 = vadd.f32 %v703, %v1503
        %v1505 = vpop.f32.mrf.mxu0
        %1506 = vmatprep.mubr.bf16.mxu0 %v963
        %1507 = vmatmul.mubr.bf16.gmra.mxu0 %v962
        %v1508 = vpop.f32.mrf.mxu0
        %v1509 = vadd.f32 %v708, %v1508
        %v1510 = vpop.f32.mrf.mxu0
        %v1511 = vpop.f32.mrf.mxu0
        %v1512 = vadd.f32 %v711, %v1511
        %v1513 = vpop.f32.mrf.mxu0
        %1514 = vmatprep.mubr.bf16.mxu0 %v971
        %1515 = vmatmul.mubr.bf16.gmra.mxu0 %v970
        %v1516 = vpop.f32.mrf.mxu0
        %v1517 = vadd.f32 %v716, %v1516
        %v1518 = vpop.f32.mrf.mxu0
        %v1519 = vpop.f32.mrf.mxu0
        %v1520 = vadd.f32 %v719, %v1519
        %v1521 = vpop.f32.mrf.mxu0
        %1522 = vmatprep.mubr.bf16.mxu0 %v979
        %1523 = vmatmul.mubr.bf16.gmra.mxu0 %v978
        %v1524 = vpop.f32.mrf.mxu0
        %v1525 = vadd.f32 %v724, %v1524
        %v1526 = vpop.f32.mrf.mxu0
        %v1527 = vpop.f32.mrf.mxu0
        %v1528 = vadd.f32 %v727, %v1527
        %v1529 = vpop.f32.mrf.mxu0
        %1530 = vmatprep.mubr.bf16.mxu0 %v987
        %1531 = vmatmul.mubr.bf16.gmra.mxu0 %v986
        %v1532 = vpop.f32.mrf.mxu0
        %v1533 = vadd.f32 %v732, %v1532
        %v1534 = vpop.f32.mrf.mxu0
        %v1535 = vpop.f32.mrf.mxu0
        %v1536 = vadd.f32 %v735, %v1535
        %v1537 = vpop.f32.mrf.mxu0
        %1538 = vdwg.mxu0
        %1539 = vmatprep.subr.bf16.mxu0 0
        %1540 = vmatpush1.bf16.msra.mxu0 %v1337
        %1541 = vmatprep.subr.bf16.mxu0 0
        %1542 = vmatpush1.bf16.msra.mxu0 %v1336
        %1543 = vmatprep.subr.bf16.mxu0 0
        %1544 = vmatpush1.bf16.msra.mxu0 %v1335
        %1545 = vmatprep.subr.bf16.mxu0 0
        %1546 = vmatpush1.bf16.msra.mxu0 %v1334
        %1547 = vmatprep.subr.bf16.mxu0 0
        %1548 = vmatpush1.bf16.msra.mxu0 %v1333
        %1549 = vmatprep.subr.bf16.mxu0 0
        %1550 = vmatpush1.bf16.msra.mxu0 %v1332
        %1551 = vmatprep.subr.bf16.mxu0 0
        %1552 = vmatpush1.bf16.msra.mxu0 %v1331
        %1553 = vmatprep.subr.bf16.mxu0 0
        %1554 = vmatpush1.bf16.msra.mxu0 %v1330
        %1555 = vmatprep.subr.bf16.mxu0 0
        %1556 = vmatpush2.bf16.msra.mxu0 %v1345
        %1557 = vmatprep.subr.bf16.mxu0 0
        %1558 = vmatpush2.bf16.msra.mxu0 %v1344
        %1559 = vmatprep.subr.bf16.mxu0 0
        %1560 = vmatpush2.bf16.msra.mxu0 %v1343
        %1561 = vmatprep.subr.bf16.mxu0 0
        %1562 = vmatpush2.bf16.msra.mxu0 %v1342
        %1563 = vmatprep.subr.bf16.mxu0 0
        %1564 = vmatpush2.bf16.msra.mxu0 %v1341
        %1565 = vmatprep.subr.bf16.mxu0 0
        %1566 = vmatpush2.bf16.msra.mxu0 %v1340
        %1567 = vmatprep.subr.bf16.mxu0 0
        %1568 = vmatpush2.bf16.msra.mxu0 %v1339
        %1569 = vmatprep.subr.bf16.mxu0 0
        %1570 = vmatpush2.bf16.msra.mxu0 %v1338
        %1571 = vmatprep.mubr.bf16.mxu0 %v933
        %1572 = vmatmul.mubr.bf16.gmra.mxu0 %v932
        %v1573 = vpop.f32.mrf.mxu0
        %v1574 = vadd.f32 %v1477, %v1573
        %v1575 = vpop.f32.mrf.mxu0
        %v1576 = vpop.f32.mrf.mxu0
        %v1577 = vadd.f32 %v1480, %v1576
        %v1578 = vpop.f32.mrf.mxu0
        %1579 = vmatprep.mubr.bf16.mxu0 %v941
        %1580 = vmatmul.mubr.bf16.gmra.mxu0 %v940
        %v1581 = vpop.f32.mrf.mxu0
        %v1582 = vadd.f32 %v1485, %v1581
        %v1583 = vpop.f32.mrf.mxu0
        %v1584 = vpop.f32.mrf.mxu0
        %v1585 = vadd.f32 %v1488, %v1584
        %v1586 = vpop.f32.mrf.mxu0
        %1587 = vmatprep.mubr.bf16.mxu0 %v949
        %1588 = vmatmul.mubr.bf16.gmra.mxu0 %v948
        %v1589 = vpop.f32.mrf.mxu0
        %v1590 = vadd.f32 %v1493, %v1589
        %v1591 = vpop.f32.mrf.mxu0
        %v1592 = vpop.f32.mrf.mxu0
        %v1593 = vadd.f32 %v1496, %v1592
        %v1594 = vpop.f32.mrf.mxu0
        %1595 = vmatprep.mubr.bf16.mxu0 %v957
        %1596 = vmatmul.mubr.bf16.gmra.mxu0 %v956
        %v1597 = vpop.f32.mrf.mxu0
        %v1598 = vadd.f32 %v1501, %v1597
        %v1599 = vpop.f32.mrf.mxu0
        %v1600 = vpop.f32.mrf.mxu0
        %v1601 = vadd.f32 %v1504, %v1600
        %v1602 = vpop.f32.mrf.mxu0
        %1603 = vmatprep.mubr.bf16.mxu0 %v965
        %1604 = vmatmul.mubr.bf16.gmra.mxu0 %v964
        %v1605 = vpop.f32.mrf.mxu0
        %v1606 = vadd.f32 %v1509, %v1605
        %v1607 = vpop.f32.mrf.mxu0
        %v1608 = vpop.f32.mrf.mxu0
        %v1609 = vadd.f32 %v1512, %v1608
        %v1610 = vpop.f32.mrf.mxu0
        %1611 = vmatprep.mubr.bf16.mxu0 %v973
        %1612 = vmatmul.mubr.bf16.gmra.mxu0 %v972
        %v1613 = vpop.f32.mrf.mxu0
        %v1614 = vadd.f32 %v1517, %v1613
        %v1615 = vpop.f32.mrf.mxu0
        %v1616 = vpop.f32.mrf.mxu0
        %v1617 = vadd.f32 %v1520, %v1616
        %v1618 = vpop.f32.mrf.mxu0
        %1619 = vmatprep.mubr.bf16.mxu0 %v981
        %1620 = vmatmul.mubr.bf16.gmra.mxu0 %v980
        %v1621 = vpop.f32.mrf.mxu0
        %v1622 = vadd.f32 %v1525, %v1621
        %v1623 = vpop.f32.mrf.mxu0
        %v1624 = vpop.f32.mrf.mxu0
        %v1625 = vadd.f32 %v1528, %v1624
        %v1626 = vpop.f32.mrf.mxu0
        %1627 = vmatprep.mubr.bf16.mxu0 %v989
        %1628 = vmatmul.mubr.bf16.gmra.mxu0 %v988
        %v1629 = vpop.f32.mrf.mxu0
        %v1630 = vadd.f32 %v1533, %v1629
        %v1631 = vpop.f32.mrf.mxu0
        %v1632 = vpop.f32.mrf.mxu0
        %v1633 = vadd.f32 %v1536, %v1632
        %v1634 = vpop.f32.mrf.mxu0
        %1635 = vdwg.mxu0
        %1636 = vmatprep.subr.bf16.mxu0 0
        %1637 = vmatpush1.bf16.msra.mxu0 %v1353
        %1638 = vmatprep.subr.bf16.mxu0 0
        %1639 = vmatpush1.bf16.msra.mxu0 %v1352
        %1640 = vmatprep.subr.bf16.mxu0 0
        %1641 = vmatpush1.bf16.msra.mxu0 %v1351
        %1642 = vmatprep.subr.bf16.mxu0 0
        %1643 = vmatpush1.bf16.msra.mxu0 %v1350
        %1644 = vmatprep.subr.bf16.mxu0 0
        %1645 = vmatpush1.bf16.msra.mxu0 %v1349
        %1646 = vmatprep.subr.bf16.mxu0 0
        %1647 = vmatpush1.bf16.msra.mxu0 %v1348
        %1648 = vmatprep.subr.bf16.mxu0 0
        %1649 = vmatpush1.bf16.msra.mxu0 %v1347
        %1650 = vmatprep.subr.bf16.mxu0 0
        %1651 = vmatpush1.bf16.msra.mxu0 %v1346
        %1652 = vmatprep.subr.bf16.mxu0 0
        %1653 = vmatpush2.bf16.msra.mxu0 %v1361
        %1654 = vmatprep.subr.bf16.mxu0 0
        %1655 = vmatpush2.bf16.msra.mxu0 %v1360
        %1656 = vmatprep.subr.bf16.mxu0 0
        %1657 = vmatpush2.bf16.msra.mxu0 %v1359
        %1658 = vmatprep.subr.bf16.mxu0 0
        %1659 = vmatpush2.bf16.msra.mxu0 %v1358
        %1660 = vmatprep.subr.bf16.mxu0 0
        %1661 = vmatpush2.bf16.msra.mxu0 %v1357
        %1662 = vmatprep.subr.bf16.mxu0 0
        %1663 = vmatpush2.bf16.msra.mxu0 %v1356
        %1664 = vmatprep.subr.bf16.mxu0 0
        %1665 = vmatpush2.bf16.msra.mxu0 %v1355
        %1666 = vmatprep.subr.bf16.mxu0 0
        %1667 = vmatpush2.bf16.msra.mxu0 %v1354
        %1668 = vmatprep.mubr.bf16.mxu0 %v935
        %1669 = vmatmul.mubr.bf16.gmra.mxu0 %v934
        %v1670 = vpop.f32.mrf.mxu0
        %v1671 = vadd.f32 %v1574, %v1670
        %v1672 = vpop.f32.mrf.mxu0
        %v1673 = vpop.f32.mrf.mxu0
        %v1674 = vadd.f32 %v1577, %v1673
        %v1675 = vpop.f32.mrf.mxu0
        %1676 = vmatprep.mubr.bf16.mxu0 %v943
        %1677 = vmatmul.mubr.bf16.gmra.mxu0 %v942
        %v1678 = vpop.f32.mrf.mxu0
        %v1679 = vadd.f32 %v1582, %v1678
        %v1680 = vpop.f32.mrf.mxu0
        %v1681 = vpop.f32.mrf.mxu0
        %v1682 = vadd.f32 %v1585, %v1681
        %v1683 = vpop.f32.mrf.mxu0
        %1684 = vmatprep.mubr.bf16.mxu0 %v951
        %1685 = vmatmul.mubr.bf16.gmra.mxu0 %v950
        %v1686 = vpop.f32.mrf.mxu0
        %v1687 = vadd.f32 %v1590, %v1686
        %v1688 = vpop.f32.mrf.mxu0
        %v1689 = vpop.f32.mrf.mxu0
        %v1690 = vadd.f32 %v1593, %v1689
        %v1691 = vpop.f32.mrf.mxu0
        %1692 = vmatprep.mubr.bf16.mxu0 %v959
        %1693 = vmatmul.mubr.bf16.gmra.mxu0 %v958
        %v1694 = vpop.f32.mrf.mxu0
        %v1695 = vadd.f32 %v1598, %v1694
        %v1696 = vpop.f32.mrf.mxu0
        %v1697 = vpop.f32.mrf.mxu0
        %v1698 = vadd.f32 %v1601, %v1697
        %v1699 = vpop.f32.mrf.mxu0
        %1700 = vmatprep.mubr.bf16.mxu0 %v967
        %1701 = vmatmul.mubr.bf16.gmra.mxu0 %v966
        %v1702 = vpop.f32.mrf.mxu0
        %v1703 = vadd.f32 %v1606, %v1702
        %v1704 = vpop.f32.mrf.mxu0
        %v1705 = vpop.f32.mrf.mxu0
        %v1706 = vadd.f32 %v1609, %v1705
        %v1707 = vpop.f32.mrf.mxu0
        %1708 = vmatprep.mubr.bf16.mxu0 %v975
        %1709 = vmatmul.mubr.bf16.gmra.mxu0 %v974
        %v1710 = vpop.f32.mrf.mxu0
        %v1711 = vadd.f32 %v1614, %v1710
        %v1712 = vpop.f32.mrf.mxu0
        %v1713 = vpop.f32.mrf.mxu0
        %v1714 = vadd.f32 %v1617, %v1713
        %v1715 = vpop.f32.mrf.mxu0
        %1716 = vmatprep.mubr.bf16.mxu0 %v983
        %1717 = vmatmul.mubr.bf16.gmra.mxu0 %v982
        %v1718 = vpop.f32.mrf.mxu0
        %v1719 = vadd.f32 %v1622, %v1718
        %v1720 = vpop.f32.mrf.mxu0
        %v1721 = vpop.f32.mrf.mxu0
        %v1722 = vadd.f32 %v1625, %v1721
        %v1723 = vpop.f32.mrf.mxu0
        %1724 = vmatprep.mubr.bf16.mxu0 %v991
        %1725 = vmatmul.mubr.bf16.gmra.mxu0 %v990
        %v1726 = vpop.f32.mrf.mxu0
        %v1727 = vadd.f32 %v1630, %v1726
        %v1728 = vpop.f32.mrf.mxu0
        %v1729 = vpop.f32.mrf.mxu0
        %v1730 = vadd.f32 %v1633, %v1729
        %v1731 = vpop.f32.mrf.mxu0
        %1732 = vdwg.mxu0
        %1733 = vmatprep.subr.bf16.mxu0 0
        %1734 = vmatpush1.bf16.msra.mxu0 %v1369
        %1735 = vmatprep.subr.bf16.mxu0 0
        %1736 = vmatpush1.bf16.msra.mxu0 %v1368
        %1737 = vmatprep.subr.bf16.mxu0 0
        %1738 = vmatpush1.bf16.msra.mxu0 %v1367
        %1739 = vmatprep.subr.bf16.mxu0 0
        %1740 = vmatpush1.bf16.msra.mxu0 %v1366
        %1741 = vmatprep.subr.bf16.mxu0 0
        %1742 = vmatpush1.bf16.msra.mxu0 %v1365
        %1743 = vmatprep.subr.bf16.mxu0 0
        %1744 = vmatpush1.bf16.msra.mxu0 %v1364
        %1745 = vmatprep.subr.bf16.mxu0 0
        %1746 = vmatpush1.bf16.msra.mxu0 %v1363
        %1747 = vmatprep.subr.bf16.mxu0 0
        %1748 = vmatpush1.bf16.msra.mxu0 %v1362
        %1749 = vmatprep.subr.bf16.mxu0 0
        %1750 = vmatpush2.bf16.msra.mxu0 %v1377
        %1751 = vmatprep.subr.bf16.mxu0 0
        %1752 = vmatpush2.bf16.msra.mxu0 %v1376
        %1753 = vmatprep.subr.bf16.mxu0 0
        %1754 = vmatpush2.bf16.msra.mxu0 %v1375
        %1755 = vmatprep.subr.bf16.mxu0 0
        %1756 = vmatpush2.bf16.msra.mxu0 %v1374
        %1757 = vmatprep.subr.bf16.mxu0 0
        %1758 = vmatpush2.bf16.msra.mxu0 %v1373
        %1759 = vmatprep.subr.bf16.mxu0 0
        %1760 = vmatpush2.bf16.msra.mxu0 %v1372
        %1761 = vmatprep.subr.bf16.mxu0 0
        %1762 = vmatpush2.bf16.msra.mxu0 %v1371
        %1763 = vmatprep.subr.bf16.mxu0 0
        %1764 = vmatpush2.bf16.msra.mxu0 %v1370
        %1765 = vmatprep.mubr.bf16.mxu0 %v937
        %1766 = vmatmul.mubr.bf16.gmra.mxu0 %v936
        %v1767 = vpop.f32.mrf.mxu0
        %v1768 = vadd.f32 %v1671, %v1767
        %v1769 = vpop.f32.mrf.mxu0
        %v1770 = vpop.f32.mrf.mxu0
        %v1771 = vadd.f32 %v1674, %v1770
        %v1772 = vpop.f32.mrf.mxu0
        %1773 = vmatprep.mubr.bf16.mxu0 %v945
        %1774 = vmatmul.mubr.bf16.gmra.mxu0 %v944
        %v1775 = vpop.f32.mrf.mxu0
        %v1776 = vadd.f32 %v1679, %v1775
        %v1777 = vpop.f32.mrf.mxu0
        %v1778 = vpop.f32.mrf.mxu0
        %v1779 = vadd.f32 %v1682, %v1778
        %v1780 = vpop.f32.mrf.mxu0
        %1781 = vmatprep.mubr.bf16.mxu0 %v953
        %1782 = vmatmul.mubr.bf16.gmra.mxu0 %v952
        %v1783 = vpop.f32.mrf.mxu0
        %v1784 = vadd.f32 %v1687, %v1783
        %v1785 = vpop.f32.mrf.mxu0
        %v1786 = vpop.f32.mrf.mxu0
        %v1787 = vadd.f32 %v1690, %v1786
        %v1788 = vpop.f32.mrf.mxu0
        %1789 = vmatprep.mubr.bf16.mxu0 %v961
        %1790 = vmatmul.mubr.bf16.gmra.mxu0 %v960
        %v1791 = vpop.f32.mrf.mxu0
        %v1792 = vadd.f32 %v1695, %v1791
        %v1793 = vpop.f32.mrf.mxu0
        %v1794 = vpop.f32.mrf.mxu0
        %v1795 = vadd.f32 %v1698, %v1794
        %v1796 = vpop.f32.mrf.mxu0
        %1797 = vmatprep.mubr.bf16.mxu0 %v969
        %1798 = vmatmul.mubr.bf16.gmra.mxu0 %v968
        %v1799 = vpop.f32.mrf.mxu0
        %v1800 = vadd.f32 %v1703, %v1799
        %v1801 = vpop.f32.mrf.mxu0
        %v1802 = vpop.f32.mrf.mxu0
        %v1803 = vadd.f32 %v1706, %v1802
        %v1804 = vpop.f32.mrf.mxu0
        %1805 = vmatprep.mubr.bf16.mxu0 %v977
        %1806 = vmatmul.mubr.bf16.gmra.mxu0 %v976
        %v1807 = vpop.f32.mrf.mxu0
        %v1808 = vadd.f32 %v1711, %v1807
        %v1809 = vpop.f32.mrf.mxu0
        %v1810 = vpop.f32.mrf.mxu0
        %v1811 = vadd.f32 %v1714, %v1810
        %v1812 = vpop.f32.mrf.mxu0
        %1813 = vmatprep.mubr.bf16.mxu0 %v985
        %1814 = vmatmul.mubr.bf16.gmra.mxu0 %v984
        %v1815 = vpop.f32.mrf.mxu0
        %v1816 = vadd.f32 %v1719, %v1815
        %v1817 = vpop.f32.mrf.mxu0
        %v1818 = vpop.f32.mrf.mxu0
        %v1819 = vadd.f32 %v1722, %v1818
        %v1820 = vpop.f32.mrf.mxu0
        %1821 = vmatprep.mubr.bf16.mxu0 %v993
        %1822 = vmatmul.mubr.bf16.gmra.mxu0 %v992
        %v1823 = vpop.f32.mrf.mxu0
        %v1824 = vadd.f32 %v1727, %v1823
        %v1825 = vpop.f32.mrf.mxu0
        %v1826 = vpop.f32.mrf.mxu0
        %v1827 = vadd.f32 %v1730, %v1826
        %v1828 = vpop.f32.mrf.mxu0
        %1829 = vdwg.mxu0
        %v1830 = vld [vmem:[%s4] sm:$0x1]
        %v1832 = vlaneseq
        %v1833 = vshrl.u32 %v1832, 7
        %v1834 = vsub.s32 0, %v1833
        %v1835 = vrot.slane %v1830, %v1834
        %v1837 = vadd.f32 %v1768, %v1835
        %v1838 = vadd.f32 %v1771, %v1835
        %v1839 = vadd.f32 %v1776, %v1835
        %v1840 = vadd.f32 %v1779, %v1835
        %v1841 = vadd.f32 %v1784, %v1835
        %v1842 = vadd.f32 %v1787, %v1835
        %v1843 = vadd.f32 %v1792, %v1835
        %v1844 = vadd.f32 %v1795, %v1835
        %v1845 = vadd.f32 %v1800, %v1835
        %v1846 = vadd.f32 %v1803, %v1835
        %v1847 = vadd.f32 %v1808, %v1835
        %v1848 = vadd.f32 %v1811, %v1835
        %v1849 = vadd.f32 %v1816, %v1835
        %v1850 = vadd.f32 %v1819, %v1835
        %v1851 = vadd.f32 %v1824, %v1835
        %v1852 = vadd.f32 %v1827, %v1835
        %v1853 = vmax.f32 %v1837, 0.0
        %v1854 = vmax.f32 %v1838, 0.0
        %v1855 = vmax.f32 %v1839, 0.0
        %v1856 = vmax.f32 %v1840, 0.0
        %v1857 = vmax.f32 %v1841, 0.0
        %v1858 = vmax.f32 %v1842, 0.0
        %v1859 = vmax.f32 %v1843, 0.0
        %v1860 = vmax.f32 %v1844, 0.0
        %v1861 = vmax.f32 %v1845, 0.0
        %v1862 = vmax.f32 %v1846, 0.0
        %v1863 = vmax.f32 %v1847, 0.0
        %v1864 = vmax.f32 %v1848, 0.0
        %v1865 = vmax.f32 %v1849, 0.0
        %v1866 = vmax.f32 %v1850, 0.0
        %v1867 = vmax.f32 %v1851, 0.0
        %v1868 = vmax.f32 %v1852, 0.0
        %v1869 = vld [vmem:[%s5] sm:$0xff]
        %v1870 = vld [vmem:[%s5 + $0x8] sm:$0xff]
        %v1871 = vld [vmem:[%s5 + $0x10] sm:$0xff]
        %v1872 = vld [vmem:[%s5 + $0x18] sm:$0xff]
        %v1873 = vld [vmem:[%s5 + $0x20] sm:$0xff]
        %v1874 = vld [vmem:[%s5 + $0x28] sm:$0xff]
        %v1875 = vld [vmem:[%s5 + $0x30] sm:$0xff]
        %v1876 = vld [vmem:[%s5 + $0x38] sm:$0xff]
        %v1877 = vld [vmem:[%s6] sm:$0x1]
        %v1879 = vlaneseq
        %v1880 = vshrl.u32 %v1879, 7
        %v1881 = vsub.s32 0, %v1880
        %v1882 = vrot.slane %v1877, %v1881
        %vm1884 = vcmask 523264
        %v1886 = vsel %vm1884, %v1853, 0
        %v1889 = vsel %vm1884, %v1854, 0
        %v1892 = vsel %vm1884, %v1855, 0
        %v1895 = vsel %vm1884, %v1856, 0
        %v1898 = vsel %vm1884, %v1857, 0
        %v1901 = vsel %vm1884, %v1858, 0
        %v1904 = vsel %vm1884, %v1859, 0
        %v1907 = vsel %vm1884, %v1860, 0
        %v1910 = vsel %vm1884, %v1861, 0
        %v1913 = vsel %vm1884, %v1862, 0
        %v1916 = vsel %vm1884, %v1863, 0
        %v1919 = vsel %vm1884, %v1864, 0
        %v1922 = vsel %vm1884, %v1865, 0
        %v1925 = vsel %vm1884, %v1866, 0
        %v1928 = vsel %vm1884, %v1867, 0
        %v1931 = vsel %vm1884, %v1868, 0
        %1933 = vmatprep.subr.mxu0 0.0
        %1934 = vmatpush1.msra.mxu0 0.0
        %1935 = vmatprep.subr.mxu0 0.0
        %1936 = vmatpush1.msra.mxu0 0.0
        %1937 = vmatprep.subr.mxu0 0.0
        %1938 = vmatpush1.msra.mxu0 0.0
        %1939 = vmatprep.subr.mxu0 0.0
        %1940 = vmatpush1.msra.mxu0 0.0
        %1941 = vmatprep.subr.mxu0 0.0
        %1942 = vmatpush1.msra.mxu0 0.0
        %1943 = vmatprep.subr.mxu0 0.0
        %1944 = vmatpush1.msra.mxu0 0.0
        %1945 = vmatprep.subr.mxu0 0.0
        %1946 = vmatpush1.msra.mxu0 0.0
        %1947 = vmatprep.subr.mxu0 0.0
        %1948 = vmatpush1.msra.mxu0 0.0
        %1949 = vmatprep.subr.mxu0 0.0
        %1950 = vmatpush1.msra.mxu0 %v1876
        %1951 = vmatprep.subr.mxu0 0.0
        %1952 = vmatpush1.msra.mxu0 %v1875
        %1953 = vmatprep.subr.mxu0 0.0
        %1954 = vmatpush1.msra.mxu0 %v1874
        %1955 = vmatprep.subr.mxu0 0.0
        %1956 = vmatpush1.msra.mxu0 %v1873
        %1957 = vmatprep.subr.mxu0 0.0
        %1958 = vmatpush1.msra.mxu0 %v1872
        %1959 = vmatprep.subr.mxu0 0.0
        %1960 = vmatpush1.msra.mxu0 %v1871
        %1961 = vmatprep.subr.mxu0 0.0
        %1962 = vmatpush1.msra.mxu0 %v1870
        %1963 = vmatprep.subr.mxu0 0.0
        %1964 = vmatpush1.msra.mxu0 %v1869
        %1965 = vmatprep.subr.mxu0 0.0
        %1966 = vmatpush2.msra.mxu0 0.0
        %1967 = vmatprep.subr.mxu0 0.0
        %1968 = vmatpush2.msra.mxu0 0.0
        %1969 = vmatprep.subr.mxu0 0.0
        %1970 = vmatpush2.msra.mxu0 0.0
        %1971 = vmatprep.subr.mxu0 0.0
        %1972 = vmatpush2.msra.mxu0 0.0
        %1973 = vmatprep.subr.mxu0 0.0
        %1974 = vmatpush2.msra.mxu0 0.0
        %1975 = vmatprep.subr.mxu0 0.0
        %1976 = vmatpush2.msra.mxu0 0.0
        %1977 = vmatprep.subr.mxu0 0.0
        %1978 = vmatpush2.msra.mxu0 0.0
        %1979 = vmatprep.subr.mxu0 0.0
        %1980 = vmatpush2.msra.mxu0 0.0
        %1981 = vmatprep.subr.mxu0 0.0
        %1982 = vmatpush2.msra.mxu0 0.0
        %1983 = vmatprep.subr.mxu0 0.0
        %1984 = vmatpush2.msra.mxu0 0.0
        %1985 = vmatprep.subr.mxu0 0.0
        %1986 = vmatpush2.msra.mxu0 0.0
        %1987 = vmatprep.subr.mxu0 0.0
        %1988 = vmatpush2.msra.mxu0 0.0
        %1989 = vmatprep.subr.mxu0 0.0
        %1990 = vmatpush2.msra.mxu0 0.0
        %1991 = vmatprep.subr.mxu0 0.0
        %1992 = vmatpush2.msra.mxu0 0.0
        %1993 = vmatprep.subr.mxu0 0.0
        %1994 = vmatpush2.msra.mxu0 0.0
        %1995 = vmatprep.subr.mxu0 0.0
        %1996 = vmatpush2.msra.mxu0 0.0
        %1997 = vmatprep.mubr.f32.mxu0 0.0
        %1998 = vmatmul.mubr.f32.gmra.mxu0 %v1886
        %v1999 = vpop.f32.mrf.mxu0
        %v2000 = vadd.f32 %v1882, %v1999
        %v2001 = vpop.f32.mrf.mxu0
        %2002 = vmatprep.mubr.f32.mxu0 0.0
        %2003 = vmatmul.mubr.f32.gmra.mxu0 %v1889
        %v2004 = vpop.f32.mrf.mxu0
        %v2005 = vadd.f32 %v1882, %v2004
        %v2006 = vpop.f32.mrf.mxu0
        %2007 = vmatprep.mubr.f32.mxu0 0.0
        %2008 = vmatmul.mubr.f32.gmra.mxu0 %v1892
        %v2009 = vpop.f32.mrf.mxu0
        %v2010 = vadd.f32 %v1882, %v2009
        %v2011 = vpop.f32.mrf.mxu0
        %2012 = vmatprep.mubr.f32.mxu0 0.0
        %2013 = vmatmul.mubr.f32.gmra.mxu0 %v1895
        %v2014 = vpop.f32.mrf.mxu0
        %v2015 = vadd.f32 %v1882, %v2014
        %v2016 = vpop.f32.mrf.mxu0
        %2017 = vmatprep.mubr.f32.mxu0 0.0
        %2018 = vmatmul.mubr.f32.gmra.mxu0 %v1898
        %v2019 = vpop.f32.mrf.mxu0
        %v2020 = vadd.f32 %v1882, %v2019
        %v2021 = vpop.f32.mrf.mxu0
        %2022 = vmatprep.mubr.f32.mxu0 0.0
        %2023 = vmatmul.mubr.f32.gmra.mxu0 %v1901
        %v2024 = vpop.f32.mrf.mxu0
        %v2025 = vadd.f32 %v1882, %v2024
        %v2026 = vpop.f32.mrf.mxu0
        %2027 = vmatprep.mubr.f32.mxu0 0.0
        %2028 = vmatmul.mubr.f32.gmra.mxu0 %v1904
        %v2029 = vpop.f32.mrf.mxu0
        %v2030 = vadd.f32 %v1882, %v2029
        %v2031 = vpop.f32.mrf.mxu0
        %2032 = vmatprep.mubr.f32.mxu0 0.0
        %2033 = vmatmul.mubr.f32.gmra.mxu0 %v1907
        %v2034 = vpop.f32.mrf.mxu0
        %v2035 = vadd.f32 %v1882, %v2034
        %v2036 = vpop.f32.mrf.mxu0
        %2037 = vmatprep.mubr.f32.mxu0 0.0
        %2038 = vmatmul.mubr.f32.gmra.mxu0 %v1910
        %v2039 = vpop.f32.mrf.mxu0
        %v2040 = vadd.f32 %v1882, %v2039
        %v2041 = vpop.f32.mrf.mxu0
        %2042 = vmatprep.mubr.f32.mxu0 0.0
        %2043 = vmatmul.mubr.f32.gmra.mxu0 %v1913
        %v2044 = vpop.f32.mrf.mxu0
        %v2045 = vadd.f32 %v1882, %v2044
        %v2046 = vpop.f32.mrf.mxu0
        %2047 = vmatprep.mubr.f32.mxu0 0.0
        %2048 = vmatmul.mubr.f32.gmra.mxu0 %v1916
        %v2049 = vpop.f32.mrf.mxu0
        %v2050 = vadd.f32 %v1882, %v2049
        %v2051 = vpop.f32.mrf.mxu0
        %2052 = vmatprep.mubr.f32.mxu0 0.0
        %2053 = vmatmul.mubr.f32.gmra.mxu0 %v1919
        %v2054 = vpop.f32.mrf.mxu0
        %v2055 = vadd.f32 %v1882, %v2054
        %v2056 = vpop.f32.mrf.mxu0
        %2057 = vmatprep.mubr.f32.mxu0 0.0
        %2058 = vmatmul.mubr.f32.gmra.mxu0 %v1922
        %v2059 = vpop.f32.mrf.mxu0
        %v2060 = vadd.f32 %v1882, %v2059
        %v2061 = vpop.f32.mrf.mxu0
        %2062 = vmatprep.mubr.f32.mxu0 0.0
        %2063 = vmatmul.mubr.f32.gmra.mxu0 %v1925
        %v2064 = vpop.f32.mrf.mxu0
        %v2065 = vadd.f32 %v1882, %v2064
        %v2066 = vpop.f32.mrf.mxu0
        %2067 = vmatprep.mubr.f32.mxu0 0.0
        %2068 = vmatmul.mubr.f32.gmra.mxu0 %v1928
        %v2069 = vpop.f32.mrf.mxu0
        %v2070 = vadd.f32 %v1882, %v2069
        %v2071 = vpop.f32.mrf.mxu0
        %2072 = vmatprep.mubr.f32.mxu0 0.0
        %2073 = vmatmul.mubr.f32.gmra.mxu0 %v1931
        %v2074 = vpop.f32.mrf.mxu0
        %v2075 = vadd.f32 %v1882, %v2074
        %v2076 = vpop.f32.mrf.mxu0
        %2077 = vdwg.mxu0
        %v2078 = vmax.f32 %v2000, 0.0
        %v2079 = vmax.f32 %v2005, 0.0
        %v2080 = vmax.f32 %v2010, 0.0
        %v2081 = vmax.f32 %v2015, 0.0
        %v2082 = vmax.f32 %v2020, 0.0
        %v2083 = vmax.f32 %v2025, 0.0
        %v2084 = vmax.f32 %v2030, 0.0
        %v2085 = vmax.f32 %v2035, 0.0
        %v2086 = vmax.f32 %v2040, 0.0
        %v2087 = vmax.f32 %v2045, 0.0
        %v2088 = vmax.f32 %v2050, 0.0
        %v2089 = vmax.f32 %v2055, 0.0
        %v2090 = vmax.f32 %v2060, 0.0
        %v2091 = vmax.f32 %v2065, 0.0
        %v2092 = vmax.f32 %v2070, 0.0
        %v2093 = vmax.f32 %v2075, 0.0
        %v2094 = vld [vmem:[%s7] sm:$0x1]
        %v2095 = vld [vmem:[#allocation2] sm:$0x1]
        %2097 = vset.pattern.permute.xlu0 0
        %2098 = vperm.xlu0 %2097, %v2095
        %v2099 = vpop.permute.xlu0 %2098
        %v2101 = vlaneseq
        %v2102 = vshrl.u32 %v2101, 7
        %v2103 = vsub.s32 0, %v2102
        %v2104 = vrot.slane %v2099, %v2103
        %vm2105 = vcmask 261120
        %v2107 = vsel %vm2105, %v2094, 0
        %v2110 = vsel %vm2105, %v2078, 0
        %v2113 = vsel %vm2105, %v2079, 0
        %v2116 = vsel %vm2105, %v2080, 0
        %v2119 = vsel %vm2105, %v2081, 0
        %v2122 = vsel %vm2105, %v2082, 0
        %v2125 = vsel %vm2105, %v2083, 0
        %v2128 = vsel %vm2105, %v2084, 0
        %v2131 = vsel %vm2105, %v2085, 0
        %v2134 = vsel %vm2105, %v2086, 0
        %v2137 = vsel %vm2105, %v2087, 0
        %v2140 = vsel %vm2105, %v2088, 0
        %v2143 = vsel %vm2105, %v2089, 0
        %v2146 = vsel %vm2105, %v2090, 0
        %v2149 = vsel %vm2105, %v2091, 0
        %v2152 = vsel %vm2105, %v2092, 0
        %v2155 = vsel %vm2105, %v2093, 0
        %2157 = vmatprep.subr.mxu0 0.0
        %2158 = vmatpush1.xpose.msra.mxu0 %v2155
        %2159 = vmatprep.subr.mxu0 0.0
        %2160 = vmatpush1.xpose.msra.mxu0 %v2152
        %2161 = vmatprep.subr.mxu0 0.0
        %2162 = vmatpush1.xpose.msra.mxu0 %v2149
        %2163 = vmatprep.subr.mxu0 0.0
        %2164 = vmatpush1.xpose.msra.mxu0 %v2146
        %2165 = vmatprep.subr.mxu0 0.0
        %2166 = vmatpush1.xpose.msra.mxu0 %v2143
        %2167 = vmatprep.subr.mxu0 0.0
        %2168 = vmatpush1.xpose.msra.mxu0 %v2140
        %2169 = vmatprep.subr.mxu0 0.0
        %2170 = vmatpush1.xpose.msra.mxu0 %v2137
        %2171 = vmatprep.subr.mxu0 0.0
        %2172 = vmatpush1.xpose.msra.mxu0 %v2134
        %2173 = vmatprep.subr.mxu0 0.0
        %2174 = vmatpush1.xpose.msra.mxu0 %v2131
        %2175 = vmatprep.subr.mxu0 0.0
        %2176 = vmatpush1.xpose.msra.mxu0 %v2128
        %2177 = vmatprep.subr.mxu0 0.0
        %2178 = vmatpush1.xpose.msra.mxu0 %v2125
        %2179 = vmatprep.subr.mxu0 0.0
        %2180 = vmatpush1.xpose.msra.mxu0 %v2122
        %2181 = vmatprep.subr.mxu0 0.0
        %2182 = vmatpush1.xpose.msra.mxu0 %v2119
        %2183 = vmatprep.subr.mxu0 0.0
        %2184 = vmatpush1.xpose.msra.mxu0 %v2116
        %2185 = vmatprep.subr.mxu0 0.0
        %2186 = vmatpush1.xpose.msra.mxu0 %v2113
        %2187 = vmatprep.subr.mxu0 0.0
        %2188 = vmatpush1.xpose.msra.mxu0 %v2110
        %2189 = vmatprep.subr.mxu0 0.0
        %2190 = vmatpush2.xpose.msra.mxu0 0.0
        %2191 = vmatprep.subr.mxu0 0.0
        %2192 = vmatpush2.xpose.msra.mxu0 0.0
        %2193 = vmatprep.subr.mxu0 0.0
        %2194 = vmatpush2.xpose.msra.mxu0 0.0
        %2195 = vmatprep.subr.mxu0 0.0
        %2196 = vmatpush2.xpose.msra.mxu0 0.0
        %2197 = vmatprep.subr.mxu0 0.0
        %2198 = vmatpush2.xpose.msra.mxu0 0.0
        %2199 = vmatprep.subr.mxu0 0.0
        %2200 = vmatpush2.xpose.msra.mxu0 0.0
        %2201 = vmatprep.subr.mxu0 0.0
        %2202 = vmatpush2.xpose.msra.mxu0 0.0
        %2203 = vmatprep.subr.mxu0 0.0
        %2204 = vmatpush2.xpose.msra.mxu0 0.0
        %2205 = vmatprep.subr.mxu0 0.0
        %2206 = vmatpush2.xpose.msra.mxu0 0.0
        %2207 = vmatprep.subr.mxu0 0.0
        %2208 = vmatpush2.xpose.msra.mxu0 0.0
        %2209 = vmatprep.subr.mxu0 0.0
        %2210 = vmatpush2.xpose.msra.mxu0 0.0
        %2211 = vmatprep.subr.mxu0 0.0
        %2212 = vmatpush2.xpose.msra.mxu0 0.0
        %2213 = vmatprep.subr.mxu0 0.0
        %2214 = vmatpush2.xpose.msra.mxu0 0.0
        %2215 = vmatprep.subr.mxu0 0.0
        %2216 = vmatpush2.xpose.msra.mxu0 0.0
        %2217 = vmatprep.subr.mxu0 0.0
        %2218 = vmatpush2.xpose.msra.mxu0 0.0
        %2219 = vmatprep.subr.mxu0 0.0
        %2220 = vmatpush2.xpose.msra.mxu0 0.0
        %2221 = vmatprep.mubr.f32.mxu0 0.0
        %2222 = vmatmul.mubr.f32.gmra.mxu0 %v2107
        %v2223 = vpop.f32.mrf.mxu0
        %v2224 = vadd.f32 %v2104, %v2223
        %v2225 = vpop.f32.mrf.mxu0
        %2226 = vdwg.mxu0
        %2227 = vst [vmem:[%s345] sm:$0x1] %v2224
        %s2228 = sand.u32 %s232, 1
        %s2229 = scalar_lea.sflag [#allocation4], %s2228
        %s2230 = sand.u32 %s232, 1
        %s2231 = scalar_lea.vmem [#allocation3], %s2230
        // Predicated region
        $region57: #{decoder_forward.1} parent=55 // pred_check
          %p2232 = pneg %p242
        $region58: #{decoder_forward.1} parent=55 // pred_check_branch
          %2234 = sbr.rel (%p2232) target = $region60
        $region59: #{decoder_forward.1} parent=55 // pred_region
          %s2236 = ssub.s32 16, 16
          %2237 = vsyncadd %s2229, %s2236
          %s2238 = smul.addr %s25, 16
          %s2239 = scalar_lea.hbm %s9, %s2238
          %s2241 = sshll.u32 %s2231, 4
          %s2242 = int_to_ptr.vmem [resolvable:$true] %s2241
          %2244 = dma.vmem_to_hbm [thread:$0]  %s2242, 16, %s2239, %s2229
        $region60: #{decoder_forward.1} parent=55 // pred_fallthru
          _
      $region56: #{decoder_forward.1} parent=5 // pred_fallthru
        _
      %p2245 = scmp.le.s32.totalorder 2, %s20
      // Predicated region
      $region61: #{decoder_forward.1} parent=5 // pred_check
        %p2246 = pneg %p2245
      $region62: #{decoder_forward.1} parent=5 // pred_check_branch
        %2248 = sbr.rel (%p2246) target = $region64
      $region63: #{decoder_forward.1} parent=5 // pred_region
        %s2249 = ssub.s32 %s20, 2
        // Predicated region
        $region65: #{decoder_forward.1} parent=63 // pred_check
          %p2250 = pneg %p248
        $region66: #{decoder_forward.1} parent=63 // pred_check_branch
          %2252 = sbr.rel (%p2250) target = $region68
        $region67: #{decoder_forward.1} parent=63 // pred_region
          %s2253 = sand.u32 %s233, 1
          %s2254 = scalar_lea.sflag [#allocation4], %s2253
          %s2255 = sand.u32 %s233, 1
          %s2256 = scalar_lea.vmem [#allocation3], %s2255
          %2257 = dma.done %s2254, 16
        $region68: #{decoder_forward.1} parent=63 // pred_fallthru
          _
      $region64: #{decoder_forward.1} parent=5 // pred_fallthru
        _
    $region6: #{decoder_forward.1} parent=1 // loop_footer
      %s24 = sadd.s32 1, %s20
    $region7: #{decoder_forward.1} parent=1 // loop_footer_branch
      %19 = sbr.rel target = $region3
    $region8: #{decoder_forward.1} parent=1 // loop_exit
      _
    %2258 = vsyncpa [#allocation4], 1
    %s2259 = scalar_lea.sflag [#allocation4], 1
    %2260 = vsyncpa %s2259, 1

</llo_original>
